<compile_context>
chip_gen: v6e
topology: v6e:2x2x1
jax: 0.10.0
libtpu: 0.0.40
codegen_flags: <defaults>
</compile_context>

<pallas_src>
import math

import jax
import jax.numpy as jnp
import numpy as np
from jax.experimental import pallas as pl
from jax.experimental.pallas import tpu as pltpu


def _round_up(v, m):
    return ((v + m - 1) // m) * m


def _fused_rbf_mlp_kernel(xa_ref, ca_ref,
                          w1_ref, b1_ref, w2_ref, b2_ref,
                          w3_ref, b3_ref, w4_ref, b4_ref,
                          w5_ref, o_ref):
    bf16 = jnp.bfloat16
    f32 = jnp.float32

    # ---- RBF_random layer ----------------------------------------------------
    # d^2 = ||x||^2 - 2 x.c + ||c||^2 as one small MXU matmul on augmented
    # features:  xa = [x_0..x_{F-1}, ||x||^2, 1, 0..]      (tn, 8)
    #            ca = [-2 c_0..-2 c_{F-1}; 1; ||c||^2; 0..] (8, C_pad)
    # f32 matmul (multi-pass MXU) keeps the cancellation in d^2 accurate.
    d2 = jnp.dot(xa_ref[...], ca_ref[...], preferred_element_type=f32)
    d2 = jnp.maximum(d2, 0.0)                    # guard tiny negative rounding
    d = jnp.sqrt(d2)                             # EUP slot (off the VALU)
    t = 1.0 - d
    t2 = t * t
    t6 = t2 * t2 * t2                            # (1 - d)^6
    h = t6 * (35.0 * d2 + 18.0 * d + 3.0)        # rbf_w / 3 folded into W1

    # ---- MLP: bf16 operands, f32 accumulation --------------------------------
    # Padded feature lanes (non-zero rbf values) are harmless: the matching
    # W1^T rows are zero.  Padded hidden lanes stay exactly 0 (zero weights,
    # zero biases, relu(0) = 0).
    h = jnp.maximum(jnp.dot(h.astype(bf16), w1_ref[...],
                            preferred_element_type=f32) + b1_ref[...], 0.0)
    h = jnp.maximum(jnp.dot(h.astype(bf16), w2_ref[...],
                            preferred_element_type=f32) + b2_ref[...], 0.0)
    h = jnp.maximum(jnp.dot(h.astype(bf16), w3_ref[...],
                            preferred_element_type=f32) + b3_ref[...], 0.0)
    h = jnp.maximum(jnp.dot(h.astype(bf16), w4_ref[...],
                            preferred_element_type=f32) + b4_ref[...], 0.0)

    # Output layer has a single unit -> cross-lane reduce (XLU) instead of a
    # degenerate N=1 matmul.  b5 is added in the wrapper.
    o_ref[...] = jnp.sum(h * w5_ref[...], axis=-1, keepdims=True)


def rbf_network_forward(x, centers, rbf_w,
                        w1, b1, w2, b2, w3, b3, w4, b4, w5, b5,
                        *, tn=1024):
    """Forward pass of RBFNetworkRandom.

    x: (N, F) f32; centers: (C, F); rbf_w: (C,);
    wk/bk: PyTorch-layout Linear params (out, in) / (out,).  Returns (N, 1) f32.
    """
    n, f = x.shape
    c = centers.shape[0]
    hdim = b1.shape[0]

    f32 = jnp.float32
    bf16 = jnp.bfloat16

    c_pad = _round_up(c, 128)
    h_pad = _round_up(hdim, 128)
    k_aug = _round_up(f + 2, 8)

    # Batch tiling: large tiles amortize the ~0.35us/step overhead, but keep
    # at least 2 grid steps so the "parallel" axis shards across both
    # TensorCores on v7x (no-op cost on single-TC v5e/v6e).
    tn = max(8, min(tn, _round_up(max((n + 1) // 2, 8), 8)))
    tn = _round_up(tn, 8)
    n_pad = _round_up(n, tn)
    grid = (n_pad // tn,)

    # --- augmented inputs for the d^2 matmul ----------------------------------
    x32 = x.astype(f32)
    x_aug = jnp.concatenate(
        [x32,
         jnp.sum(x32 * x32, axis=1, keepdims=True),
         jnp.ones((n, 1), f32)], axis=1)                       # (n, f+2)
    x_aug = jnp.pad(x_aug, ((0, n_pad - n), (0, k_aug - (f + 2))))

    ct = centers.astype(f32)                                   # (c, f)
    c_aug = jnp.concatenate(
        [-2.0 * ct.T,
         jnp.ones((1, c), f32),
         jnp.sum(ct * ct, axis=1)[None, :]], axis=0)           # (f+2, c)
    c_aug = jnp.pad(c_aug, ((0, k_aug - (f + 2)), (0, c_pad - c)))

    # --- linear weights: transpose, pad, fold rbf_w/3 into W1, cast to bf16 ---
    def pad_linear(w, b, in_pad, out_pad, row_scale=None):
        wt = w.astype(f32).T                                   # (in, out)
        if row_scale is not None:
            wt = wt * row_scale[:, None]
        wt = jnp.pad(wt, ((0, in_pad - wt.shape[0]), (0, out_pad - wt.shape[1])))
        bp = jnp.pad(b.astype(f32)[None, :], ((0, 0), (0, out_pad - b.shape[0])))
        return wt.astype(bf16), bp

    w1_p, b1_p = pad_linear(w1, b1, c_pad, h_pad,
                            row_scale=rbf_w.astype(f32) / 3.0)
    w2_p, b2_p = pad_linear(w2, b2, h_pad, h_pad)
    w3_p, b3_p = pad_linear(w3, b3, h_pad, h_pad)
    w4_p, b4_p = pad_linear(w4, b4, h_pad, h_pad)
    w5_row = jnp.pad(w5.astype(f32), ((0, 0), (0, h_pad - hdim)))  # (1, h_pad)

    const = lambda i: (0, 0)
    out = pl.pallas_call(
        _fused_rbf_mlp_kernel,
        out_shape=jax.ShapeDtypeStruct((n_pad, 1), f32),
        grid=grid,
        in_specs=[
            pl.BlockSpec((tn, k_aug), lambda i: (i, 0)),   # augmented x tile
            pl.BlockSpec((k_aug, c_pad), const),           # augmented centers
            pl.BlockSpec((c_pad, h_pad), const),           # W1^T * rbf_w/3 (bf16)
            pl.BlockSpec((1, h_pad), const),               # b1 (f32)
            pl.BlockSpec((h_pad, h_pad), const),           # W2^T (bf16)
            pl.BlockSpec((1, h_pad), const),               # b2
            pl.BlockSpec((h_pad, h_pad), const),           # W3^T (bf16)
            pl.BlockSpec((1, h_pad), const),               # b3
            pl.BlockSpec((h_pad, h_pad), const),           # W4^T (bf16)
            pl.BlockSpec((1, h_pad), const),               # b4
            pl.BlockSpec((1, h_pad), const),               # W5 row (f32)
        ],
        out_specs=pl.BlockSpec((tn, 1), lambda i: (i, 0)),
        compiler_params=pltpu.CompilerParams(
            dimension_semantics=("parallel",)),
    )(x_aug, c_aug, w1_p, b1_p, w2_p, b2_p, w3_p, b3_p, w4_p, b4_p, w5_row)

    # Add the single scalar output bias here (cheaper than a padded VMEM tile).
    return out[:n, :] + b5.astype(f32)[None, :]


def rbf_network_reference(x, centers, rbf_w,
                          w1, b1, w2, b2, w3, b3, w4, b4, w5, b5):
    """Pure-JAX mirror of the PyTorch forward."""
    diff = x[:, None, :] - centers[None, :, :]
    d = jnp.sqrt(jnp.sum(diff * diff, axis=-1))
    rbf = (1.0 - d) ** 6 * (35.0 * d ** 2 + 18.0 * d + 3.0) / 3.0
    h = rbf * rbf_w[None, :]
    h = jax.nn.relu(h @ w1.T + b1)
    h = jax.nn.relu(h @ w2.T + b2)
    h = jax.nn.relu(h @ w3.T + b3)
    h = jax.nn.relu(h @ w4.T + b4)
    return h @ w5.T + b5


if __name__ == "__main__":
    key = jax.random.PRNGKey(0)
    ks = jax.random.split(key, 8)

    in_dims, out_dims, hidden, batch = 2, 64, 100, 200

    x = jax.random.uniform(ks[0], (batch, in_dims), dtype=jnp.float32)
    centers = jax.random.uniform(ks[1], (out_dims, in_dims), dtype=jnp.float32,
                                 minval=-1.0, maxval=1.0)
    rbf_w = jax.random.uniform(ks[2], (out_dims,), dtype=jnp.float32,
                               minval=-1.0, maxval=1.0)

    def linear_init(k, fan_in, fan_out):
        kw, kb = jax.random.split(k)
        bound = 1.0 / math.sqrt(fan_in)
        w = jax.random.uniform(kw, (fan_out, fan_in), dtype=jnp.float32,
                               minval=-bound, maxval=bound)
        b = jax.random.uniform(kb, (fan_out,), dtype=jnp.float32,
                               minval=-bound, maxval=bound)
        return w, b

    w1, b1 = linear_init(ks[3], out_dims, hidden)
    w2, b2 = linear_init(ks[4], hidden, hidden)
    w3, b3 = linear_init(ks[5], hidden, hidden)
    w4, b4 = linear_init(ks[6], hidden, hidden)
    w5, b5 = linear_init(ks[7], hidden, 1)

    out = rbf_network_forward(x, centers, rbf_w,
                              w1, b1, w2, b2, w3, b3, w4, b4, w5, b5)
    out = jax.block_until_ready(out)

    ref = rbf_network_reference(x, centers, rbf_w,
                                w1, b1, w2, b2, w3, b3, w4, b4, w5, b5)
    ref = jax.block_until_ready(ref)

    # Kernel uses bf16 matmul operands (f32 accumulation); the XLA reference
    # uses default-precision f32 matmuls.  Compare at bf16-level tolerance
    # scaled to the output magnitude.
    out_np = np.asarray(out)
    ref_np = np.asarray(ref)
    scale = float(np.max(np.abs(ref_np))) + 1e-6
    np.testing.assert_allclose(out_np, ref_np, rtol=3e-2, atol=3e-2 * scale)

    print("KERNEL_OK")
</pallas_src>

<mosaic_0001>
module attributes {stable_mosaic.version = 11 : i64} {
  func.func @_fused_rbf_mlp_kernel(%arg0: i32, %arg1: memref<104x8xf32, #tpu.memory_space<vmem>>, %arg2: memref<8x128xf32, #tpu.memory_space<vmem>>, %arg3: memref<128x128xbf16, #tpu.memory_space<vmem>>, %arg4: memref<1x128xf32, #tpu.memory_space<vmem>>, %arg5: memref<128x128xbf16, #tpu.memory_space<vmem>>, %arg6: memref<1x128xf32, #tpu.memory_space<vmem>>, %arg7: memref<128x128xbf16, #tpu.memory_space<vmem>>, %arg8: memref<1x128xf32, #tpu.memory_space<vmem>>, %arg9: memref<128x128xbf16, #tpu.memory_space<vmem>>, %arg10: memref<1x128xf32, #tpu.memory_space<vmem>>, %arg11: memref<1x128xf32, #tpu.memory_space<vmem>>, %arg12: memref<104x1xf32, #tpu.memory_space<vmem>>) attributes {dimension_semantics = [#tpu.dimension_semantics<parallel>], iteration_bounds = array<i64: 2>, scalar_prefetch = 0 : i64, scratch_operands = 0 : i64, tpu.core_type = #tpu.core_type<tc>, window_params = [{transform_indices = @transform_0, window_bounds = array<i64: 104, 8>}, {pipeline_mode = #tpu.pipeline_mode<synchronous>, transform_indices = @transform_1, window_bounds = array<i64: 8, 128>}, {pipeline_mode = #tpu.pipeline_mode<synchronous>, transform_indices = @transform_2, window_bounds = array<i64: 128, 128>}, {pipeline_mode = #tpu.pipeline_mode<synchronous>, transform_indices = @transform_3, window_bounds = array<i64: 1, 128>}, {pipeline_mode = #tpu.pipeline_mode<synchronous>, transform_indices = @transform_4, window_bounds = array<i64: 128, 128>}, {pipeline_mode = #tpu.pipeline_mode<synchronous>, transform_indices = @transform_5, window_bounds = array<i64: 1, 128>}, {pipeline_mode = #tpu.pipeline_mode<synchronous>, transform_indices = @transform_6, window_bounds = array<i64: 128, 128>}, {pipeline_mode = #tpu.pipeline_mode<synchronous>, transform_indices = @transform_7, window_bounds = array<i64: 1, 128>}, {pipeline_mode = #tpu.pipeline_mode<synchronous>, transform_indices = @transform_8, window_bounds = array<i64: 128, 128>}, {pipeline_mode = #tpu.pipeline_mode<synchronous>, transform_indices = @transform_9, window_bounds = array<i64: 1, 128>}, {pipeline_mode = #tpu.pipeline_mode<synchronous>, transform_indices = @transform_10, window_bounds = array<i64: 1, 128>}, {transform_indices = @transform_11, window_bounds = array<i64: 104, 1>}]} {
    %c0 = arith.constant 0 : index
    %c0_0 = arith.constant 0 : index
    %0 = vector.load %arg1[%c0, %c0_0] : memref<104x8xf32, #tpu.memory_space<vmem>>, vector<104x8xf32>
    %c0_1 = arith.constant 0 : index
    %c0_2 = arith.constant 0 : index
    %1 = vector.load %arg2[%c0_1, %c0_2] : memref<8x128xf32, #tpu.memory_space<vmem>>, vector<8x128xf32>
    %cst = arith.constant dense<0.000000e+00> : vector<104x128xf32>
    %2 = tpu.matmul %0, %1, %cst {dimension_numbers = #tpu.dot_dimension_numbers<[1], [0], [0], [1], [0, 0, 1, 1], [], []>} : vector<104x8xf32>, vector<8x128xf32>, vector<104x128xf32> -> vector<104x128xf32>
    %cst_3 = arith.constant 0.000000e+00 : f32
    %3 = vector.broadcast %cst_3 : f32 to vector<104x128xf32>
    %4 = arith.maximumf %2, %3 : vector<104x128xf32>
    %5 = math.sqrt %4 : vector<104x128xf32>
    %cst_4 = arith.constant 1.000000e+00 : f32
    %6 = vector.broadcast %cst_4 : f32 to vector<104x128xf32>
    %7 = arith.subf %6, %5 : vector<104x128xf32>
    %8 = arith.mulf %7, %7 : vector<104x128xf32>
    %9 = arith.mulf %8, %8 : vector<104x128xf32>
    %10 = arith.mulf %9, %8 : vector<104x128xf32>
    %cst_5 = arith.constant 3.500000e+01 : f32
    %11 = vector.broadcast %cst_5 : f32 to vector<104x128xf32>
    %12 = arith.mulf %11, %4 : vector<104x128xf32>
    %cst_6 = arith.constant 1.800000e+01 : f32
    %13 = vector.broadcast %cst_6 : f32 to vector<104x128xf32>
    %14 = arith.mulf %13, %5 : vector<104x128xf32>
    %15 = arith.addf %12, %14 : vector<104x128xf32>
    %cst_7 = arith.constant 3.000000e+00 : f32
    %16 = vector.broadcast %cst_7 : f32 to vector<104x128xf32>
    %17 = arith.addf %15, %16 : vector<104x128xf32>
    %18 = arith.mulf %10, %17 : vector<104x128xf32>
    %19 = arith.truncf %18 : vector<104x128xf32> to vector<104x128xbf16>
    %c0_8 = arith.constant 0 : index
    %c0_9 = arith.constant 0 : index
    %20 = vector.load %arg3[%c0_8, %c0_9] : memref<128x128xbf16, #tpu.memory_space<vmem>>, vector<128x128xbf16>
    %cst_10 = arith.constant dense<0.000000e+00> : vector<104x128xf32>
    %21 = tpu.matmul %19, %20, %cst_10 {dimension_numbers = #tpu.dot_dimension_numbers<[1], [0], [0], [1], [0, 0, 1, 1], [], []>} : vector<104x128xbf16>, vector<128x128xbf16>, vector<104x128xf32> -> vector<104x128xf32>
    %c0_11 = arith.constant 0 : index
    %c0_12 = arith.constant 0 : index
    %22 = vector.load %arg4[%c0_11, %c0_12] : memref<1x128xf32, #tpu.memory_space<vmem>>, vector<1x128xf32>
    %23 = vector.broadcast %22 : vector<1x128xf32> to vector<104x128xf32>
    %24 = arith.addf %21, %23 : vector<104x128xf32>
    %cst_13 = arith.constant 0.000000e+00 : f32
    %25 = vector.broadcast %cst_13 : f32 to vector<104x128xf32>
    %26 = arith.maximumf %24, %25 : vector<104x128xf32>
    %27 = arith.truncf %26 : vector<104x128xf32> to vector<104x128xbf16>
    %c0_14 = arith.constant 0 : index
    %c0_15 = arith.constant 0 : index
    %28 = vector.load %arg5[%c0_14, %c0_15] : memref<128x128xbf16, #tpu.memory_space<vmem>>, vector<128x128xbf16>
    %cst_16 = arith.constant dense<0.000000e+00> : vector<104x128xf32>
    %29 = tpu.matmul %27, %28, %cst_16 {dimension_numbers = #tpu.dot_dimension_numbers<[1], [0], [0], [1], [0, 0, 1, 1], [], []>} : vector<104x128xbf16>, vector<128x128xbf16>, vector<104x128xf32> -> vector<104x128xf32>
    %c0_17 = arith.constant 0 : index
    %c0_18 = arith.constant 0 : index
    %30 = vector.load %arg6[%c0_17, %c0_18] : memref<1x128xf32, #tpu.memory_space<vmem>>, vector<1x128xf32>
    %31 = vector.broadcast %30 : vector<1x128xf32> to vector<104x128xf32>
    %32 = arith.addf %29, %31 : vector<104x128xf32>
    %cst_19 = arith.constant 0.000000e+00 : f32
    %33 = vector.broadcast %cst_19 : f32 to vector<104x128xf32>
    %34 = arith.maximumf %32, %33 : vector<104x128xf32>
    %35 = arith.truncf %34 : vector<104x128xf32> to vector<104x128xbf16>
    %c0_20 = arith.constant 0 : index
    %c0_21 = arith.constant 0 : index
    %36 = vector.load %arg7[%c0_20, %c0_21] : memref<128x128xbf16, #tpu.memory_space<vmem>>, vector<128x128xbf16>
    %cst_22 = arith.constant dense<0.000000e+00> : vector<104x128xf32>
    %37 = tpu.matmul %35, %36, %cst_22 {dimension_numbers = #tpu.dot_dimension_numbers<[1], [0], [0], [1], [0, 0, 1, 1], [], []>} : vector<104x128xbf16>, vector<128x128xbf16>, vector<104x128xf32> -> vector<104x128xf32>
    %c0_23 = arith.constant 0 : index
    %c0_24 = arith.constant 0 : index
    %38 = vector.load %arg8[%c0_23, %c0_24] : memref<1x128xf32, #tpu.memory_space<vmem>>, vector<1x128xf32>
    %39 = vector.broadcast %38 : vector<1x128xf32> to vector<104x128xf32>
    %40 = arith.addf %37, %39 : vector<104x128xf32>
    %cst_25 = arith.constant 0.000000e+00 : f32
    %41 = vector.broadcast %cst_25 : f32 to vector<104x128xf32>
    %42 = arith.maximumf %40, %41 : vector<104x128xf32>
    %43 = arith.truncf %42 : vector<104x128xf32> to vector<104x128xbf16>
    %c0_26 = arith.constant 0 : index
    %c0_27 = arith.constant 0 : index
    %44 = vector.load %arg9[%c0_26, %c0_27] : memref<128x128xbf16, #tpu.memory_space<vmem>>, vector<128x128xbf16>
    %cst_28 = arith.constant dense<0.000000e+00> : vector<104x128xf32>
    %45 = tpu.matmul %43, %44, %cst_28 {dimension_numbers = #tpu.dot_dimension_numbers<[1], [0], [0], [1], [0, 0, 1, 1], [], []>} : vector<104x128xbf16>, vector<128x128xbf16>, vector<104x128xf32> -> vector<104x128xf32>
    %c0_29 = arith.constant 0 : index
    %c0_30 = arith.constant 0 : index
    %46 = vector.load %arg10[%c0_29, %c0_30] : memref<1x128xf32, #tpu.memory_space<vmem>>, vector<1x128xf32>
    %47 = vector.broadcast %46 : vector<1x128xf32> to vector<104x128xf32>
    %48 = arith.addf %45, %47 : vector<104x128xf32>
    %cst_31 = arith.constant 0.000000e+00 : f32
    %49 = vector.broadcast %cst_31 : f32 to vector<104x128xf32>
    %50 = arith.maximumf %48, %49 : vector<104x128xf32>
    %c0_32 = arith.constant 0 : index
    %c0_33 = arith.constant 0 : index
    %51 = vector.load %arg11[%c0_32, %c0_33] : memref<1x128xf32, #tpu.memory_space<vmem>>, vector<1x128xf32>
    %52 = vector.broadcast %51 : vector<1x128xf32> to vector<104x128xf32>
    %53 = arith.mulf %50, %52 : vector<104x128xf32>
    %cst_34 = arith.constant dense<0.000000e+00> : vector<104xf32>
    %54 = vector.multi_reduction <add>, %53, %cst_34 [1] : vector<104x128xf32> to vector<104xf32>
    %55 = vector.shape_cast %54 : vector<104xf32> to vector<104x1xf32>
    %c0_35 = arith.constant 0 : index
    %c0_36 = arith.constant 0 : index
    %56 = vector.load %arg12[%c0_35, %c0_36] : memref<104x1xf32, #tpu.memory_space<vmem>>, vector<104x1xf32>
    tpu.vector_store %arg12[%c0_35, %c0_36], %55 {strides = array<i32>} : memref<104x1xf32, #tpu.memory_space<vmem>>, vector<104x1xf32>,
    return
  }
  func.func @transform_0(%arg0: i32) -> (i32, i32) {
    %c0_i32 = arith.constant 0 : i32
    %c0_i32_0 = arith.constant 0 : i32
    return %arg0, %c0_i32 : i32, i32
  }
  func.func @transform_1(%arg0: i32) -> (i32, i32) {
    %c0_i32 = arith.constant 0 : i32
    %c0_i32_0 = arith.constant 0 : i32
    %c0_i32_1 = arith.constant 0 : i32
    return %c0_i32, %c0_i32_0 : i32, i32
  }
  func.func @transform_2(%arg0: i32) -> (i32, i32) {
    %c0_i32 = arith.constant 0 : i32
    %c0_i32_0 = arith.constant 0 : i32
    %c0_i32_1 = arith.constant 0 : i32
    return %c0_i32, %c0_i32_0 : i32, i32
  }
  func.func @transform_3(%arg0: i32) -> (i32, i32) {
    %c0_i32 = arith.constant 0 : i32
    %c0_i32_0 = arith.constant 0 : i32
    %c0_i32_1 = arith.constant 0 : i32
    return %c0_i32, %c0_i32_0 : i32, i32
  }
  func.func @transform_4(%arg0: i32) -> (i32, i32) {
    %c0_i32 = arith.constant 0 : i32
    %c0_i32_0 = arith.constant 0 : i32
    %c0_i32_1 = arith.constant 0 : i32
    return %c0_i32, %c0_i32_0 : i32, i32
  }
  func.func @transform_5(%arg0: i32) -> (i32, i32) {
    %c0_i32 = arith.constant 0 : i32
    %c0_i32_0 = arith.constant 0 : i32
    %c0_i32_1 = arith.constant 0 : i32
    return %c0_i32, %c0_i32_0 : i32, i32
  }
  func.func @transform_6(%arg0: i32) -> (i32, i32) {
    %c0_i32 = arith.constant 0 : i32
    %c0_i32_0 = arith.constant 0 : i32
    %c0_i32_1 = arith.constant 0 : i32
    return %c0_i32, %c0_i32_0 : i32, i32
  }
  func.func @transform_7(%arg0: i32) -> (i32, i32) {
    %c0_i32 = arith.constant 0 : i32
    %c0_i32_0 = arith.constant 0 : i32
    %c0_i32_1 = arith.constant 0 : i32
    return %c0_i32, %c0_i32_0 : i32, i32
  }
  func.func @transform_8(%arg0: i32) -> (i32, i32) {
    %c0_i32 = arith.constant 0 : i32
    %c0_i32_0 = arith.constant 0 : i32
    %c0_i32_1 = arith.constant 0 : i32
    return %c0_i32, %c0_i32_0 : i32, i32
  }
  func.func @transform_9(%arg0: i32) -> (i32, i32) {
    %c0_i32 = arith.constant 0 : i32
    %c0_i32_0 = arith.constant 0 : i32
    %c0_i32_1 = arith.constant 0 : i32
    return %c0_i32, %c0_i32_0 : i32, i32
  }
  func.func @transform_10(%arg0: i32) -> (i32, i32) {
    %c0_i32 = arith.constant 0 : i32
    %c0_i32_0 = arith.constant 0 : i32
    %c0_i32_1 = arith.constant 0 : i32
    return %c0_i32, %c0_i32_0 : i32, i32
  }
  func.func @transform_11(%arg0: i32) -> (i32, i32) {
    %c0_i32 = arith.constant 0 : i32
    %c0_i32_0 = arith.constant 0 : i32
    return %arg0, %c0_i32 : i32, i32
  }
}

</mosaic_0001>

<llo_original>
// kernel: tpu_custom_call.1
$region0: #{tpu_custom_call.1}
  #allocation0 [shape = 'u32[]', space=smem, size = 0x4, offset = 0x4, fixed_abs, tag = 'smem constant byte address 0x4 - core index']
  #allocation1 [shape = 'u32[144,128]{1,0:T(1,128)}', space=vmem, size = 0x12000, scoped, tag = 'internal scratch']
  %s0 = inlined_call_operand.vmem [shape: f32[208,8], index: 0, kind: input, shape index: {}]
  %s1 = inlined_call_operand.vmem [shape: f32[8,128], index: 1, kind: input, shape index: {}]
  %s2 = inlined_call_operand.vmem [shape: bf16[128,128], index: 2, kind: input, shape index: {}]
  %s3 = inlined_call_operand.vmem [shape: f32[1,128], index: 3, kind: input, shape index: {}]
  %s4 = inlined_call_operand.vmem [shape: bf16[128,128], index: 4, kind: input, shape index: {}]
  %s5 = inlined_call_operand.vmem [shape: f32[1,128], index: 5, kind: input, shape index: {}]
  %s6 = inlined_call_operand.vmem [shape: bf16[128,128], index: 6, kind: input, shape index: {}]
  %s7 = inlined_call_operand.vmem [shape: f32[1,128], index: 7, kind: input, shape index: {}]
  %s8 = inlined_call_operand.hbm [shape: bf16[128,128], index: 8, kind: input, shape index: {}]
  %s9 = inlined_call_operand.vmem [shape: f32[1,128], index: 9, kind: input, shape index: {}]
  %s10 = inlined_call_operand.vmem [shape: f32[1,128], index: 10, kind: input, shape index: {}]
  %s11 = inlined_call_operand.vmem [shape: f32[208,1], index: 11, kind: output, shape index: {}]
  %s12 = sld [smem:[#allocation0]]
  $region81: #{tpu_custom_call.1} parent=0
    _
  %s14 = ssub.s32 1, %s12
  %s15 = scalar_select 0, %s14, %s12
  $region1: #{tpu_custom_call.1} parent=0
    #allocation2 [shape = 'u8[32768]{0}', space=vmem, size = 0x8000, scoped, tag = 'input window, operand 8, single buffered']
    #allocation3 [shape = 's32[2]{0}', space=sflag, size = 0x8, scoped, tag = 'scoped memory for tpu_custom_call.1']
    %16 = vsyncpa [#allocation3], 0
    loop: start=0, step=1, limit=4
    $region2: #{tpu_custom_call.1} parent=1 // loop_pre_header
      _
    $region3: #{tpu_custom_call.1} parent=1 // loop_header
      %s18 = sphi 0, %s22
      %p19 = scmp.ge.s32.totalorder %s18, 4
      %s28 = sphi 0, %s30
      %s31 = sphi 0, %s28
      %s32 = sphi 0, %s31
      %s48 = sphi 0, %s32
      %s52 = sphi 0, %s52
      %s54 = sphi 0, %s52
      %s55 = sphi 0, %s54
      %s69 = sphi 0, %s55
      %s73 = sphi 0, %s73
      %s75 = sphi 0, %s73
      %s76 = sphi 0, %s75
      %s90 = sphi 0, %s76
      %s94 = sphi 0, %s94
      %s96 = sphi 0, %s94
      %s97 = sphi 0, %s96
      %s111 = sphi 0, %s97
      %s115 = sphi 0, %s115
      %s117 = sphi 0, %s115
      %s118 = sphi 0, %s117
      %s132 = sphi 0, %s118
      %s136 = sphi 0, %s136
      %s138 = sphi 0, %s136
      %s139 = sphi 0, %s138
      %s153 = sphi 0, %s139
      %s157 = sphi 0, %s157
      %s159 = sphi 0, %s157
      %s160 = sphi 0, %s159
      %s174 = sphi 0, %s160
      %s178 = sphi 0, %s178
      %s180 = sphi 0, %s178
      %s181 = sphi 0, %s180
      %s195 = sphi 0, %s181
      %s199 = sphi 0, %s199
      %s201 = sphi 0, %s199
      %s202 = sphi 0, %s201
      %s216 = sphi 0, %s202
      %s220 = sphi 0, %s220
      %s222 = sphi 0, %s220
      %s223 = sphi 0, %s222
      %s237 = sphi 0, %s223
      %s241 = sphi 0, %s241
      %s243 = sphi 0, %s241
      %s244 = sphi 0, %s243
      %s258 = sphi 0, %s244
      %s264 = sphi 0, %s266
      %s267 = sphi 0, %s264
      %s268 = sphi 0, %s267
      %s284 = sphi 0, %s268
    $region4: #{tpu_custom_call.1} parent=1 // loop_header_branch
      %21 = sbr.rel (%p19) target = $region8
    $region5: #{tpu_custom_call.1} parent=1 // loop_body
      %s23 = ssub.s32 %s18, 1
      %s24 = ssub.s32 %s18, 2
      %s25 = sadd.s32 %s18, 1
      %s26 = ssub.s32 %s18, %s25
      %p27 = scmp.eq.s32.totalorder %s26, 0
      %s29 = sadd.s32 %s28, 1
      %s30 = scalar_select %p27, %s28, %s29
      %p33 = pneg %p27
      %p34 = scmp.eq.s32.totalorder %s18, 1
      %p35 = por %p33, %p34
      %p36 = scmp.ne.s32.totalorder %s28, %s31
      %p37 = scmp.eq.s32.totalorder %s18, 0
      %p38 = por %p36, %p37
      %p39 = scmp.ne.s32.totalorder %s28, %s31
      %p40 = scmp.eq.s32.totalorder %s23, 1
      %p41 = por %p39, %p40
      %p42 = scmp.ne.s32.totalorder %s31, %s32
      %p43 = scmp.eq.s32.totalorder %s23, 0
      %p44 = por %p42, %p43
      %p45 = scmp.ne.s32.totalorder %s31, %s32
      %p46 = scmp.eq.s32.totalorder %s24, 1
      %p47 = por %p45, %p46
      %p49 = scmp.ne.s32.totalorder %s32, %s48
      %p50 = scmp.eq.s32.totalorder %s24, 0
      %p51 = por %p49, %p50
      %s53 = sadd.s32 %s52, 1
      %p56 = scmp.eq.s32.totalorder %s18, 1
      %p57 = scmp.ne.s32.totalorder %s52, %s54
      %p58 = scmp.eq.s32.totalorder %s18, 0
      %p59 = por %p57, %p58
      %p60 = scmp.ne.s32.totalorder %s52, %s54
      %p61 = scmp.eq.s32.totalorder %s23, 1
      %p62 = por %p60, %p61
      %p63 = scmp.ne.s32.totalorder %s54, %s55
      %p64 = scmp.eq.s32.totalorder %s23, 0
      %p65 = por %p63, %p64
      %p66 = scmp.ne.s32.totalorder %s54, %s55
      %p67 = scmp.eq.s32.totalorder %s24, 1
      %p68 = por %p66, %p67
      %p70 = scmp.ne.s32.totalorder %s55, %s69
      %p71 = scmp.eq.s32.totalorder %s24, 0
      %p72 = por %p70, %p71
      %s74 = sadd.s32 %s73, 1
      %p77 = scmp.eq.s32.totalorder %s18, 1
      %p78 = scmp.ne.s32.totalorder %s73, %s75
      %p79 = scmp.eq.s32.totalorder %s18, 0
      %p80 = por %p78, %p79
      %p81 = scmp.ne.s32.totalorder %s73, %s75
      %p82 = scmp.eq.s32.totalorder %s23, 1
      %p83 = por %p81, %p82
      %p84 = scmp.ne.s32.totalorder %s75, %s76
      %p85 = scmp.eq.s32.totalorder %s23, 0
      %p86 = por %p84, %p85
      %p87 = scmp.ne.s32.totalorder %s75, %s76
      %p88 = scmp.eq.s32.totalorder %s24, 1
      %p89 = por %p87, %p88
      %p91 = scmp.ne.s32.totalorder %s76, %s90
      %p92 = scmp.eq.s32.totalorder %s24, 0
      %p93 = por %p91, %p92
      %s95 = sadd.s32 %s94, 1
      %p98 = scmp.eq.s32.totalorder %s18, 1
      %p99 = scmp.ne.s32.totalorder %s94, %s96
      %p100 = scmp.eq.s32.totalorder %s18, 0
      %p101 = por %p99, %p100
      %p102 = scmp.ne.s32.totalorder %s94, %s96
      %p103 = scmp.eq.s32.totalorder %s23, 1
      %p104 = por %p102, %p103
      %p105 = scmp.ne.s32.totalorder %s96, %s97
      %p106 = scmp.eq.s32.totalorder %s23, 0
      %p107 = por %p105, %p106
      %p108 = scmp.ne.s32.totalorder %s96, %s97
      %p109 = scmp.eq.s32.totalorder %s24, 1
      %p110 = por %p108, %p109
      %p112 = scmp.ne.s32.totalorder %s97, %s111
      %p113 = scmp.eq.s32.totalorder %s24, 0
      %p114 = por %p112, %p113
      %s116 = sadd.s32 %s115, 1
      %p119 = scmp.eq.s32.totalorder %s18, 1
      %p120 = scmp.ne.s32.totalorder %s115, %s117
      %p121 = scmp.eq.s32.totalorder %s18, 0
      %p122 = por %p120, %p121
      %p123 = scmp.ne.s32.totalorder %s115, %s117
      %p124 = scmp.eq.s32.totalorder %s23, 1
      %p125 = por %p123, %p124
      %p126 = scmp.ne.s32.totalorder %s117, %s118
      %p127 = scmp.eq.s32.totalorder %s23, 0
      %p128 = por %p126, %p127
      %p129 = scmp.ne.s32.totalorder %s117, %s118
      %p130 = scmp.eq.s32.totalorder %s24, 1
      %p131 = por %p129, %p130
      %p133 = scmp.ne.s32.totalorder %s118, %s132
      %p134 = scmp.eq.s32.totalorder %s24, 0
      %p135 = por %p133, %p134
      %s137 = sadd.s32 %s136, 1
      %p140 = scmp.eq.s32.totalorder %s18, 1
      %p141 = scmp.ne.s32.totalorder %s136, %s138
      %p142 = scmp.eq.s32.totalorder %s18, 0
      %p143 = por %p141, %p142
      %p144 = scmp.ne.s32.totalorder %s136, %s138
      %p145 = scmp.eq.s32.totalorder %s23, 1
      %p146 = por %p144, %p145
      %p147 = scmp.ne.s32.totalorder %s138, %s139
      %p148 = scmp.eq.s32.totalorder %s23, 0
      %p149 = por %p147, %p148
      %p150 = scmp.ne.s32.totalorder %s138, %s139
      %p151 = scmp.eq.s32.totalorder %s24, 1
      %p152 = por %p150, %p151
      %p154 = scmp.ne.s32.totalorder %s139, %s153
      %p155 = scmp.eq.s32.totalorder %s24, 0
      %p156 = por %p154, %p155
      %s158 = sadd.s32 %s157, 1
      %p161 = scmp.eq.s32.totalorder %s18, 1
      %p162 = scmp.ne.s32.totalorder %s157, %s159
      %p163 = scmp.eq.s32.totalorder %s18, 0
      %p164 = por %p162, %p163
      %p165 = scmp.ne.s32.totalorder %s157, %s159
      %p166 = scmp.eq.s32.totalorder %s23, 1
      %p167 = por %p165, %p166
      %p168 = scmp.ne.s32.totalorder %s159, %s160
      %p169 = scmp.eq.s32.totalorder %s23, 0
      %p170 = por %p168, %p169
      %p171 = scmp.ne.s32.totalorder %s159, %s160
      %p172 = scmp.eq.s32.totalorder %s24, 1
      %p173 = por %p171, %p172
      %p175 = scmp.ne.s32.totalorder %s160, %s174
      %p176 = scmp.eq.s32.totalorder %s24, 0
      %p177 = por %p175, %p176
      %s179 = sadd.s32 %s178, 1
      %p182 = scmp.eq.s32.totalorder %s18, 1
      %p183 = scmp.ne.s32.totalorder %s178, %s180
      %p184 = scmp.eq.s32.totalorder %s18, 0
      %p185 = por %p183, %p184
      %p186 = scmp.ne.s32.totalorder %s178, %s180
      %p187 = scmp.eq.s32.totalorder %s23, 1
      %p188 = por %p186, %p187
      %p189 = scmp.ne.s32.totalorder %s180, %s181
      %p190 = scmp.eq.s32.totalorder %s23, 0
      %p191 = por %p189, %p190
      %p192 = scmp.ne.s32.totalorder %s180, %s181
      %p193 = scmp.eq.s32.totalorder %s24, 1
      %p194 = por %p192, %p193
      %p196 = scmp.ne.s32.totalorder %s181, %s195
      %p197 = scmp.eq.s32.totalorder %s24, 0
      %p198 = por %p196, %p197
      %s200 = sadd.s32 %s199, 1
      %p203 = scmp.eq.s32.totalorder %s18, 1
      %p204 = scmp.ne.s32.totalorder %s199, %s201
      %p205 = scmp.eq.s32.totalorder %s18, 0
      %p206 = por %p204, %p205
      %p207 = scmp.ne.s32.totalorder %s199, %s201
      %p208 = scmp.eq.s32.totalorder %s23, 1
      %p209 = por %p207, %p208
      %p210 = scmp.ne.s32.totalorder %s201, %s202
      %p211 = scmp.eq.s32.totalorder %s23, 0
      %p212 = por %p210, %p211
      %p213 = scmp.ne.s32.totalorder %s201, %s202
      %p214 = scmp.eq.s32.totalorder %s24, 1
      %p215 = por %p213, %p214
      %p217 = scmp.ne.s32.totalorder %s202, %s216
      %p218 = scmp.eq.s32.totalorder %s24, 0
      %p219 = por %p217, %p218
      %s221 = sadd.s32 %s220, 1
      %p224 = scmp.eq.s32.totalorder %s18, 1
      %p225 = scmp.ne.s32.totalorder %s220, %s222
      %p226 = scmp.eq.s32.totalorder %s18, 0
      %p227 = por %p225, %p226
      %p228 = scmp.ne.s32.totalorder %s220, %s222
      %p229 = scmp.eq.s32.totalorder %s23, 1
      %p230 = por %p228, %p229
      %p231 = scmp.ne.s32.totalorder %s222, %s223
      %p232 = scmp.eq.s32.totalorder %s23, 0
      %p233 = por %p231, %p232
      %p234 = scmp.ne.s32.totalorder %s222, %s223
      %p235 = scmp.eq.s32.totalorder %s24, 1
      %p236 = por %p234, %p235
      %p238 = scmp.ne.s32.totalorder %s223, %s237
      %p239 = scmp.eq.s32.totalorder %s24, 0
      %p240 = por %p238, %p239
      %s242 = sadd.s32 %s241, 1
      %p245 = scmp.eq.s32.totalorder %s18, 1
      %p246 = scmp.ne.s32.totalorder %s241, %s243
      %p247 = scmp.eq.s32.totalorder %s18, 0
      %p248 = por %p246, %p247
      %p249 = scmp.ne.s32.totalorder %s241, %s243
      %p250 = scmp.eq.s32.totalorder %s23, 1
      %p251 = por %p249, %p250
      %p252 = scmp.ne.s32.totalorder %s243, %s244
      %p253 = scmp.eq.s32.totalorder %s23, 0
      %p254 = por %p252, %p253
      %p255 = scmp.ne.s32.totalorder %s243, %s244
      %p256 = scmp.eq.s32.totalorder %s24, 1
      %p257 = por %p255, %p256
      %p259 = scmp.ne.s32.totalorder %s244, %s258
      %p260 = scmp.eq.s32.totalorder %s24, 0
      %p261 = por %p259, %p260
      %s262 = ssub.s32 %s18, %s25
      %p263 = scmp.eq.s32.totalorder %s262, 0
      %s265 = sadd.s32 %s264, 1
      %s266 = scalar_select %p263, %s264, %s265
      %p269 = pneg %p263
      %p270 = scmp.eq.s32.totalorder %s18, 1
      %p271 = por %p269, %p270
      %p272 = scmp.ne.s32.totalorder %s264, %s267
      %p273 = scmp.eq.s32.totalorder %s18, 0
      %p274 = por %p272, %p273
      %p275 = scmp.ne.s32.totalorder %s264, %s267
      %p276 = scmp.eq.s32.totalorder %s23, 1
      %p277 = por %p275, %p276
      %p278 = scmp.ne.s32.totalorder %s267, %s268
      %p279 = scmp.eq.s32.totalorder %s23, 0
      %p280 = por %p278, %p279
      %p281 = scmp.ne.s32.totalorder %s267, %s268
      %p282 = scmp.eq.s32.totalorder %s24, 1
      %p283 = por %p281, %p282
      %p285 = scmp.ne.s32.totalorder %s268, %s284
      %p286 = scmp.eq.s32.totalorder %s24, 0
      %p287 = por %p285, %p286
      %p288 = scmp.le.s32.totalorder 1, %s18
      %p289 = scmp.lt.s32.totalorder %s18, 3
      %p290 = pnand %p288, %p289
      %p291 = pneg %p290
      // Predicated region
      $region9: #{tpu_custom_call.1} parent=5 // pred_check
        _
      $region10: #{tpu_custom_call.1} parent=5 // pred_check_branch
        %293 = sbr.rel (%p290) target = $region12
      $region11: #{tpu_custom_call.1} parent=5 // pred_region
        %s294 = ssub.s32 %s18, 1
        // Predicated region
        $region13: #{tpu_custom_call.1} parent=11 // pred_check
          %p295 = pneg %p65
        $region14: #{tpu_custom_call.1} parent=11 // pred_check_branch
          %297 = sbr.rel (%p295) target = $region16
        $region15: #{tpu_custom_call.1} parent=11 // pred_region
          _
        $region16: #{tpu_custom_call.1} parent=11 // pred_fallthru
          _
        // Predicated region
        $region17: #{tpu_custom_call.1} parent=11 // pred_check
          %p298 = pneg %p86
        $region18: #{tpu_custom_call.1} parent=11 // pred_check_branch
          %300 = sbr.rel (%p298) target = $region20
        $region19: #{tpu_custom_call.1} parent=11 // pred_region
          _
        $region20: #{tpu_custom_call.1} parent=11 // pred_fallthru
          _
        // Predicated region
        $region21: #{tpu_custom_call.1} parent=11 // pred_check
          %p301 = pneg %p107
        $region22: #{tpu_custom_call.1} parent=11 // pred_check_branch
          %303 = sbr.rel (%p301) target = $region24
        $region23: #{tpu_custom_call.1} parent=11 // pred_region
          _
        $region24: #{tpu_custom_call.1} parent=11 // pred_fallthru
          _
        // Predicated region
        $region25: #{tpu_custom_call.1} parent=11 // pred_check
          %p304 = pneg %p128
        $region26: #{tpu_custom_call.1} parent=11 // pred_check_branch
          %306 = sbr.rel (%p304) target = $region28
        $region27: #{tpu_custom_call.1} parent=11 // pred_region
          _
        $region28: #{tpu_custom_call.1} parent=11 // pred_fallthru
          _
        // Predicated region
        $region29: #{tpu_custom_call.1} parent=11 // pred_check
          %p307 = pneg %p149
        $region30: #{tpu_custom_call.1} parent=11 // pred_check_branch
          %309 = sbr.rel (%p307) target = $region32
        $region31: #{tpu_custom_call.1} parent=11 // pred_region
          _
        $region32: #{tpu_custom_call.1} parent=11 // pred_fallthru
          _
        // Predicated region
        $region33: #{tpu_custom_call.1} parent=11 // pred_check
          %p310 = pneg %p170
        $region34: #{tpu_custom_call.1} parent=11 // pred_check_branch
          %312 = sbr.rel (%p310) target = $region36
        $region35: #{tpu_custom_call.1} parent=11 // pred_region
          _
        $region36: #{tpu_custom_call.1} parent=11 // pred_fallthru
          _
        // Predicated region
        $region37: #{tpu_custom_call.1} parent=11 // pred_check
          %p313 = pneg %p191
        $region38: #{tpu_custom_call.1} parent=11 // pred_check_branch
          %315 = sbr.rel (%p313) target = $region40
        $region39: #{tpu_custom_call.1} parent=11 // pred_region
          _
        $region40: #{tpu_custom_call.1} parent=11 // pred_fallthru
          _
        // Predicated region
        $region41: #{tpu_custom_call.1} parent=11 // pred_check
          %p316 = pneg %p212
        $region42: #{tpu_custom_call.1} parent=11 // pred_check_branch
          %318 = sbr.rel (%p316) target = $region44
        $region43: #{tpu_custom_call.1} parent=11 // pred_region
          %s320 = ssub.s32 1024, 1024
          %321 = vsyncadd [#allocation3], %s320
          %s322 = sshll.u32 [#allocation2], 4
          %s323 = int_to_ptr.vmem [resolvable:$true] %s322
          %328 = dma.hbm_to_vmem [thread:$0]  %s8, 1024, %s323, [#allocation3], 64, 64, 4
        $region44: #{tpu_custom_call.1} parent=11 // pred_fallthru
          _
        // Predicated region
        $region45: #{tpu_custom_call.1} parent=11 // pred_check
          %p329 = pneg %p233
        $region46: #{tpu_custom_call.1} parent=11 // pred_check_branch
          %331 = sbr.rel (%p329) target = $region48
        $region47: #{tpu_custom_call.1} parent=11 // pred_region
          _
        $region48: #{tpu_custom_call.1} parent=11 // pred_fallthru
          _
        // Predicated region
        $region49: #{tpu_custom_call.1} parent=11 // pred_check
          %p332 = pneg %p254
        $region50: #{tpu_custom_call.1} parent=11 // pred_check_branch
          %334 = sbr.rel (%p332) target = $region52
        $region51: #{tpu_custom_call.1} parent=11 // pred_region
          _
        $region52: #{tpu_custom_call.1} parent=11 // pred_fallthru
          _
      $region12: #{tpu_custom_call.1} parent=5 // pred_fallthru
        _
      %p335 = scmp.lt.s32.totalorder %s18, 2
      // Predicated region
      $region53: #{tpu_custom_call.1} parent=5 // pred_check
        %p336 = pneg %p335
      $region54: #{tpu_custom_call.1} parent=5 // pred_check_branch
        %338 = sbr.rel (%p336) target = $region56
      $region55: #{tpu_custom_call.1} parent=5 // pred_region
        // Predicated region
        $region57: #{tpu_custom_call.1} parent=55 // pred_check
          %p339 = pneg %p38
        $region58: #{tpu_custom_call.1} parent=55 // pred_check_branch
          %341 = sbr.rel (%p339) target = $region60
        $region59: #{tpu_custom_call.1} parent=55 // pred_region
          %s342 = smul.u32 13, %s18
          %p343 = scmp.lt.s32.totalorder %s342, 25
          %s344 = scalar_select %p343, %s342, 25
          %s345 = smul.addr %s344, 8
          %s346 = scalar_lea.vmem %s0, %s345
          %s347 = smul.u32 13, %s18
        $region60: #{tpu_custom_call.1} parent=55 // pred_fallthru
          _
      $region56: #{tpu_custom_call.1} parent=5 // pred_fallthru
        _
      %p348 = scmp.le.s32.totalorder 1, %s18
      %p349 = scmp.lt.s32.totalorder %s18, 3
      %p350 = pnand %p348, %p349
      %p351 = pneg %p350
      // Predicated region
      $region61: #{tpu_custom_call.1} parent=5 // pred_check
        _
      $region62: #{tpu_custom_call.1} parent=5 // pred_check_branch
        %353 = sbr.rel (%p350) target = $region64
      $region63: #{tpu_custom_call.1} parent=5 // pred_region
        %s354 = ssub.s32 %s18, 1
        // Predicated region
        $region65: #{tpu_custom_call.1} parent=63 // pred_check
          %p355 = pneg %p212
        $region66: #{tpu_custom_call.1} parent=63 // pred_check_branch
          %357 = sbr.rel (%p355) target = $region68
        $region67: #{tpu_custom_call.1} parent=63 // pred_region
          %358 = dma.done [#allocation3], 1024
        $region68: #{tpu_custom_call.1} parent=63 // pred_fallthru
          _
        %s359 = smul.u32 13, %s23
        %p360 = scmp.lt.s32.totalorder %s359, 25
        %s361 = scalar_select %p360, %s359, 25
        %s362 = smul.addr %s361, 8
        %s363 = scalar_lea.vmem %s0, %s362
        %p364 = pneg %p44
        %p365 = pneg %p41
        %p366 = pneg %p65
        %p367 = pneg %p62
        %p368 = pneg %p86
        %p369 = pneg %p83
        %p370 = pneg %p107
        %p371 = pneg %p104
        %p372 = pneg %p128
        %p373 = pneg %p125
        %p374 = pneg %p149
        %p375 = pneg %p146
        %p376 = pneg %p170
        %p377 = pneg %p167
        %p378 = pneg %p191
        %p379 = pneg %p188
        %p380 = pneg %p212
        %p381 = pneg %p209
        %p382 = pneg %p233
        %p383 = pneg %p230
        %p384 = pneg %p254
        %p385 = pneg %p251
        %p386 = pneg %p280
        %p387 = pneg %p277
        %s388 = smul.u32 13, %s23
        %p389 = scmp.lt.s32.totalorder %s388, 25
        %s390 = scalar_select %p389, %s388, 25
        %s391 = smul.addr %s390, 8
        %s392 = scalar_lea.vmem %s11, %s391
        %s393 = smul.u32 13, %s23
        %p394 = scmp.lt.s32.totalorder %s393, 25
        %s395 = scalar_select %p394, %s393, 25
        %s396 = smul.addr %s395, 8
        %s397 = scalar_lea.vmem %s0, %s396
        %s398 = smul.u32 13, %s23
        %s399 = smul.u32 13, %s23
        %p400 = scmp.lt.s32.totalorder %s399, 25
        %s401 = scalar_select %p400, %s399, 25
        %s402 = smul.addr %s401, 8
        %s403 = scalar_lea.vmem %s11, %s402
        %s404 = smul.u32 13, %s23
        %v406 = vld [vmem:[%s397] sm:$0xff]
        %v407 = vld [vmem:[%s397 + $0x8] sm:$0xff]
        %v408 = vld [vmem:[%s397 + $0x10] sm:$0xff]
        %v409 = vld [vmem:[%s397 + $0x18] sm:$0xff]
        %v410 = vld [vmem:[%s397 + $0x20] sm:$0xff]
        %v411 = vld [vmem:[%s397 + $0x28] sm:$0xff]
        %v412 = vld [vmem:[%s397 + $0x30] sm:$0xff]
        %v413 = vld [vmem:[%s397 + $0x38] sm:$0xff]
        %v414 = vld [vmem:[%s397 + $0x40] sm:$0xff]
        %v415 = vld [vmem:[%s397 + $0x48] sm:$0xff]
        %v416 = vld [vmem:[%s397 + $0x50] sm:$0xff]
        %v417 = vld [vmem:[%s397 + $0x58] sm:$0xff]
        %v418 = vld [vmem:[%s397 + $0x60] sm:$0xff]
        %v419 = vld [vmem:[%s1] sm:$0xff]
        %vm420 = vcmask 64512
        %v422 = vsel %vm420, %v406, 0
        %v425 = vsel %vm420, %v407, 0
        %v428 = vsel %vm420, %v408, 0
        %v431 = vsel %vm420, %v409, 0
        %v434 = vsel %vm420, %v410, 0
        %v437 = vsel %vm420, %v411, 0
        %v440 = vsel %vm420, %v412, 0
        %v443 = vsel %vm420, %v413, 0
        %v446 = vsel %vm420, %v414, 0
        %v449 = vsel %vm420, %v415, 0
        %v452 = vsel %vm420, %v416, 0
        %v455 = vsel %vm420, %v417, 0
        %v458 = vsel %vm420, %v418, 0
        %460 = vmatprep.subr.mxu0 0.0
        %461 = vmatpush1.msra.mxu0 0.0
        %462 = vmatprep.subr.mxu0 0.0
        %463 = vmatpush1.msra.mxu0 0.0
        %464 = vmatprep.subr.mxu0 0.0
        %465 = vmatpush1.msra.mxu0 0.0
        %466 = vmatprep.subr.mxu0 0.0
        %467 = vmatpush1.msra.mxu0 0.0
        %468 = vmatprep.subr.mxu0 0.0
        %469 = vmatpush1.msra.mxu0 0.0
        %470 = vmatprep.subr.mxu0 0.0
        %471 = vmatpush1.msra.mxu0 0.0
        %472 = vmatprep.subr.mxu0 0.0
        %473 = vmatpush1.msra.mxu0 0.0
        %474 = vmatprep.subr.mxu0 0.0
        %475 = vmatpush1.msra.mxu0 0.0
        %476 = vmatprep.subr.mxu0 0.0
        %477 = vmatpush1.msra.mxu0 0.0
        %478 = vmatprep.subr.mxu0 0.0
        %479 = vmatpush1.msra.mxu0 0.0
        %480 = vmatprep.subr.mxu0 0.0
        %481 = vmatpush1.msra.mxu0 0.0
        %482 = vmatprep.subr.mxu0 0.0
        %483 = vmatpush1.msra.mxu0 0.0
        %484 = vmatprep.subr.mxu0 0.0
        %485 = vmatpush1.msra.mxu0 0.0
        %486 = vmatprep.subr.mxu0 0.0
        %487 = vmatpush1.msra.mxu0 0.0
        %488 = vmatprep.subr.mxu0 0.0
        %489 = vmatpush1.msra.mxu0 0.0
        %490 = vmatprep.subr.mxu0 0.0
        %491 = vmatpush1.msra.mxu0 %v419
        %492 = vmatprep.subr.mxu0 0.0
        %493 = vmatpush2.msra.mxu0 0.0
        %494 = vmatprep.subr.mxu0 0.0
        %495 = vmatpush2.msra.mxu0 0.0
        %496 = vmatprep.subr.mxu0 0.0
        %497 = vmatpush2.msra.mxu0 0.0
        %498 = vmatprep.subr.mxu0 0.0
        %499 = vmatpush2.msra.mxu0 0.0
        %500 = vmatprep.subr.mxu0 0.0
        %501 = vmatpush2.msra.mxu0 0.0
        %502 = vmatprep.subr.mxu0 0.0
        %503 = vmatpush2.msra.mxu0 0.0
        %504 = vmatprep.subr.mxu0 0.0
        %505 = vmatpush2.msra.mxu0 0.0
        %506 = vmatprep.subr.mxu0 0.0
        %507 = vmatpush2.msra.mxu0 0.0
        %508 = vmatprep.subr.mxu0 0.0
        %509 = vmatpush2.msra.mxu0 0.0
        %510 = vmatprep.subr.mxu0 0.0
        %511 = vmatpush2.msra.mxu0 0.0
        %512 = vmatprep.subr.mxu0 0.0
        %513 = vmatpush2.msra.mxu0 0.0
        %514 = vmatprep.subr.mxu0 0.0
        %515 = vmatpush2.msra.mxu0 0.0
        %516 = vmatprep.subr.mxu0 0.0
        %517 = vmatpush2.msra.mxu0 0.0
        %518 = vmatprep.subr.mxu0 0.0
        %519 = vmatpush2.msra.mxu0 0.0
        %520 = vmatprep.subr.mxu0 0.0
        %521 = vmatpush2.msra.mxu0 0.0
        %522 = vmatprep.subr.mxu0 0.0
        %523 = vmatpush2.msra.mxu0 0.0
        %524 = vmatprep.mubr.f32.mxu0 0.0
        %525 = vmatmul.mubr.f32.gmra.mxu0 %v422
        %v526 = vpop.f32.mrf.mxu0
        %v527 = vadd.f32 0.0, %v526
        %v528 = vpop.f32.mrf.mxu0
        %529 = vmatprep.mubr.f32.mxu0 0.0
        %530 = vmatmul.mubr.f32.gmra.mxu0 %v425
        %v531 = vpop.f32.mrf.mxu0
        %v532 = vadd.f32 0.0, %v531
        %v533 = vpop.f32.mrf.mxu0
        %534 = vmatprep.mubr.f32.mxu0 0.0
        %535 = vmatmul.mubr.f32.gmra.mxu0 %v428
        %v536 = vpop.f32.mrf.mxu0
        %v537 = vadd.f32 0.0, %v536
        %v538 = vpop.f32.mrf.mxu0
        %539 = vmatprep.mubr.f32.mxu0 0.0
        %540 = vmatmul.mubr.f32.gmra.mxu0 %v431
        %v541 = vpop.f32.mrf.mxu0
        %v542 = vadd.f32 0.0, %v541
        %v543 = vpop.f32.mrf.mxu0
        %544 = vmatprep.mubr.f32.mxu0 0.0
        %545 = vmatmul.mubr.f32.gmra.mxu0 %v434
        %v546 = vpop.f32.mrf.mxu0
        %v547 = vadd.f32 0.0, %v546
        %v548 = vpop.f32.mrf.mxu0
        %549 = vmatprep.mubr.f32.mxu0 0.0
        %550 = vmatmul.mubr.f32.gmra.mxu0 %v437
        %v551 = vpop.f32.mrf.mxu0
        %v552 = vadd.f32 0.0, %v551
        %v553 = vpop.f32.mrf.mxu0
        %554 = vmatprep.mubr.f32.mxu0 0.0
        %555 = vmatmul.mubr.f32.gmra.mxu0 %v440
        %v556 = vpop.f32.mrf.mxu0
        %v557 = vadd.f32 0.0, %v556
        %v558 = vpop.f32.mrf.mxu0
        %559 = vmatprep.mubr.f32.mxu0 0.0
        %560 = vmatmul.mubr.f32.gmra.mxu0 %v443
        %v561 = vpop.f32.mrf.mxu0
        %v562 = vadd.f32 0.0, %v561
        %v563 = vpop.f32.mrf.mxu0
        %564 = vmatprep.mubr.f32.mxu0 0.0
        %565 = vmatmul.mubr.f32.gmra.mxu0 %v446
        %v566 = vpop.f32.mrf.mxu0
        %v567 = vadd.f32 0.0, %v566
        %v568 = vpop.f32.mrf.mxu0
        %569 = vmatprep.mubr.f32.mxu0 0.0
        %570 = vmatmul.mubr.f32.gmra.mxu0 %v449
        %v571 = vpop.f32.mrf.mxu0
        %v572 = vadd.f32 0.0, %v571
        %v573 = vpop.f32.mrf.mxu0
        %574 = vmatprep.mubr.f32.mxu0 0.0
        %575 = vmatmul.mubr.f32.gmra.mxu0 %v452
        %v576 = vpop.f32.mrf.mxu0
        %v577 = vadd.f32 0.0, %v576
        %v578 = vpop.f32.mrf.mxu0
        %579 = vmatprep.mubr.f32.mxu0 0.0
        %580 = vmatmul.mubr.f32.gmra.mxu0 %v455
        %v581 = vpop.f32.mrf.mxu0
        %v582 = vadd.f32 0.0, %v581
        %v583 = vpop.f32.mrf.mxu0
        %584 = vmatprep.mubr.f32.mxu0 0.0
        %585 = vmatmul.mubr.f32.gmra.mxu0 %v458
        %v586 = vpop.f32.mrf.mxu0
        %v587 = vadd.f32 0.0, %v586
        %v588 = vpop.f32.mrf.mxu0
        %589 = vdwg.mxu0
        %v590 = vmax.f32 %v527, 0.0
        %v591 = vmax.f32 %v532, 0.0
        %v592 = vmax.f32 %v537, 0.0
        %v593 = vmax.f32 %v542, 0.0
        %v594 = vmax.f32 %v547, 0.0
        %v595 = vmax.f32 %v552, 0.0
        %v596 = vmax.f32 %v557, 0.0
        %v597 = vmax.f32 %v562, 0.0
        %v598 = vmax.f32 %v567, 0.0
        %v599 = vmax.f32 %v572, 0.0
        %v600 = vmax.f32 %v577, 0.0
        %v601 = vmax.f32 %v582, 0.0
        %v602 = vmax.f32 %v587, 0.0
        %v603 = vrsqrt.pop %v590
        %v604 = vmul.f32 %v590, %v603
        %vm605 = vcmp.eq.f32.partialorder %v590, inf
        %v606 = vsel %vm605, %v590, %v604
        %vm607 = vcmp.eq.f32.partialorder %v590, 0.0
        %v608 = vand.u32 %v590, 2147483648
        %v609 = vsel %vm607, %v608, %v606
        %v610 = vrsqrt.pop %v591
        %v611 = vmul.f32 %v591, %v610
        %vm612 = vcmp.eq.f32.partialorder %v591, inf
        %v613 = vsel %vm612, %v591, %v611
        %vm614 = vcmp.eq.f32.partialorder %v591, 0.0
        %v615 = vand.u32 %v591, 2147483648
        %v616 = vsel %vm614, %v615, %v613
        %v617 = vrsqrt.pop %v592
        %v618 = vmul.f32 %v592, %v617
        %vm619 = vcmp.eq.f32.partialorder %v592, inf
        %v620 = vsel %vm619, %v592, %v618
        %vm621 = vcmp.eq.f32.partialorder %v592, 0.0
        %v622 = vand.u32 %v592, 2147483648
        %v623 = vsel %vm621, %v622, %v620
        %v624 = vrsqrt.pop %v593
        %v625 = vmul.f32 %v593, %v624
        %vm626 = vcmp.eq.f32.partialorder %v593, inf
        %v627 = vsel %vm626, %v593, %v625
        %vm628 = vcmp.eq.f32.partialorder %v593, 0.0
        %v629 = vand.u32 %v593, 2147483648
        %v630 = vsel %vm628, %v629, %v627
        %v631 = vrsqrt.pop %v594
        %v632 = vmul.f32 %v594, %v631
        %vm633 = vcmp.eq.f32.partialorder %v594, inf
        %v634 = vsel %vm633, %v594, %v632
        %vm635 = vcmp.eq.f32.partialorder %v594, 0.0
        %v636 = vand.u32 %v594, 2147483648
        %v637 = vsel %vm635, %v636, %v634
        %v638 = vrsqrt.pop %v595
        %v639 = vmul.f32 %v595, %v638
        %vm640 = vcmp.eq.f32.partialorder %v595, inf
        %v641 = vsel %vm640, %v595, %v639
        %vm642 = vcmp.eq.f32.partialorder %v595, 0.0
        %v643 = vand.u32 %v595, 2147483648
        %v644 = vsel %vm642, %v643, %v641
        %v645 = vrsqrt.pop %v596
        %v646 = vmul.f32 %v596, %v645
        %vm647 = vcmp.eq.f32.partialorder %v596, inf
        %v648 = vsel %vm647, %v596, %v646
        %vm649 = vcmp.eq.f32.partialorder %v596, 0.0
        %v650 = vand.u32 %v596, 2147483648
        %v651 = vsel %vm649, %v650, %v648
        %v652 = vrsqrt.pop %v597
        %v653 = vmul.f32 %v597, %v652
        %vm654 = vcmp.eq.f32.partialorder %v597, inf
        %v655 = vsel %vm654, %v597, %v653
        %vm656 = vcmp.eq.f32.partialorder %v597, 0.0
        %v657 = vand.u32 %v597, 2147483648
        %v658 = vsel %vm656, %v657, %v655
        %v659 = vrsqrt.pop %v598
        %v660 = vmul.f32 %v598, %v659
        %vm661 = vcmp.eq.f32.partialorder %v598, inf
        %v662 = vsel %vm661, %v598, %v660
        %vm663 = vcmp.eq.f32.partialorder %v598, 0.0
        %v664 = vand.u32 %v598, 2147483648
        %v665 = vsel %vm663, %v664, %v662
        %v666 = vrsqrt.pop %v599
        %v667 = vmul.f32 %v599, %v666
        %vm668 = vcmp.eq.f32.partialorder %v599, inf
        %v669 = vsel %vm668, %v599, %v667
        %vm670 = vcmp.eq.f32.partialorder %v599, 0.0
        %v671 = vand.u32 %v599, 2147483648
        %v672 = vsel %vm670, %v671, %v669
        %v673 = vrsqrt.pop %v600
        %v674 = vmul.f32 %v600, %v673
        %vm675 = vcmp.eq.f32.partialorder %v600, inf
        %v676 = vsel %vm675, %v600, %v674
        %vm677 = vcmp.eq.f32.partialorder %v600, 0.0
        %v678 = vand.u32 %v600, 2147483648
        %v679 = vsel %vm677, %v678, %v676
        %v680 = vrsqrt.pop %v601
        %v681 = vmul.f32 %v601, %v680
        %vm682 = vcmp.eq.f32.partialorder %v601, inf
        %v683 = vsel %vm682, %v601, %v681
        %vm684 = vcmp.eq.f32.partialorder %v601, 0.0
        %v685 = vand.u32 %v601, 2147483648
        %v686 = vsel %vm684, %v685, %v683
        %v687 = vrsqrt.pop %v602
        %v688 = vmul.f32 %v602, %v687
        %vm689 = vcmp.eq.f32.partialorder %v602, inf
        %v690 = vsel %vm689, %v602, %v688
        %vm691 = vcmp.eq.f32.partialorder %v602, 0.0
        %v692 = vand.u32 %v602, 2147483648
        %v693 = vsel %vm691, %v692, %v690
        %v694 = vsub.f32 1.0, %v609
        %v695 = vsub.f32 1.0, %v616
        %v696 = vsub.f32 1.0, %v623
        %v697 = vsub.f32 1.0, %v630
        %v698 = vsub.f32 1.0, %v637
        %v699 = vsub.f32 1.0, %v644
        %v700 = vsub.f32 1.0, %v651
        %v701 = vsub.f32 1.0, %v658
        %v702 = vsub.f32 1.0, %v665
        %v703 = vsub.f32 1.0, %v672
        %v704 = vsub.f32 1.0, %v679
        %v705 = vsub.f32 1.0, %v686
        %v706 = vsub.f32 1.0, %v693
        %v707 = vmul.f32 %v694, %v694
        %v708 = vmul.f32 %v695, %v695
        %v709 = vmul.f32 %v696, %v696
        %v710 = vmul.f32 %v697, %v697
        %v711 = vmul.f32 %v698, %v698
        %v712 = vmul.f32 %v699, %v699
        %v713 = vmul.f32 %v700, %v700
        %v714 = vmul.f32 %v701, %v701
        %v715 = vmul.f32 %v702, %v702
        %v716 = vmul.f32 %v703, %v703
        %v717 = vmul.f32 %v704, %v704
        %v718 = vmul.f32 %v705, %v705
        %v719 = vmul.f32 %v706, %v706
        %v720 = vmul.f32 %v707, %v707
        %v721 = vmul.f32 %v708, %v708
        %v722 = vmul.f32 %v709, %v709
        %v723 = vmul.f32 %v710, %v710
        %v724 = vmul.f32 %v711, %v711
        %v725 = vmul.f32 %v712, %v712
        %v726 = vmul.f32 %v713, %v713
        %v727 = vmul.f32 %v714, %v714
        %v728 = vmul.f32 %v715, %v715
        %v729 = vmul.f32 %v716, %v716
        %v730 = vmul.f32 %v717, %v717
        %v731 = vmul.f32 %v718, %v718
        %v732 = vmul.f32 %v719, %v719
        %v733 = vmul.f32 %v720, %v707
        %v734 = vmul.f32 %v721, %v708
        %v735 = vmul.f32 %v722, %v709
        %v736 = vmul.f32 %v723, %v710
        %v737 = vmul.f32 %v724, %v711
        %v738 = vmul.f32 %v725, %v712
        %v739 = vmul.f32 %v726, %v713
        %v740 = vmul.f32 %v727, %v714
        %v741 = vmul.f32 %v728, %v715
        %v742 = vmul.f32 %v729, %v716
        %v743 = vmul.f32 %v730, %v717
        %v744 = vmul.f32 %v731, %v718
        %v745 = vmul.f32 %v732, %v719
        %v746 = vmul.f32 %v590, 35.0
        %v747 = vmul.f32 %v591, 35.0
        %v748 = vmul.f32 %v592, 35.0
        %v749 = vmul.f32 %v593, 35.0
        %v750 = vmul.f32 %v594, 35.0
        %v751 = vmul.f32 %v595, 35.0
        %v752 = vmul.f32 %v596, 35.0
        %v753 = vmul.f32 %v597, 35.0
        %v754 = vmul.f32 %v598, 35.0
        %v755 = vmul.f32 %v599, 35.0
        %v756 = vmul.f32 %v600, 35.0
        %v757 = vmul.f32 %v601, 35.0
        %v758 = vmul.f32 %v602, 35.0
        %v759 = vmul.f32 %v609, 18.0
        %v760 = vmul.f32 %v616, 18.0
        %v761 = vmul.f32 %v623, 18.0
        %v762 = vmul.f32 %v630, 18.0
        %v763 = vmul.f32 %v637, 18.0
        %v764 = vmul.f32 %v644, 18.0
        %v765 = vmul.f32 %v651, 18.0
        %v766 = vmul.f32 %v658, 18.0
        %v767 = vmul.f32 %v665, 18.0
        %v768 = vmul.f32 %v672, 18.0
        %v769 = vmul.f32 %v679, 18.0
        %v770 = vmul.f32 %v686, 18.0
        %v771 = vmul.f32 %v693, 18.0
        %v772 = vadd.f32 %v746, %v759
        %v773 = vadd.f32 %v747, %v760
        %v774 = vadd.f32 %v748, %v761
        %v775 = vadd.f32 %v749, %v762
        %v776 = vadd.f32 %v750, %v763
        %v777 = vadd.f32 %v751, %v764
        %v778 = vadd.f32 %v752, %v765
        %v779 = vadd.f32 %v753, %v766
        %v780 = vadd.f32 %v754, %v767
        %v781 = vadd.f32 %v755, %v768
        %v782 = vadd.f32 %v756, %v769
        %v783 = vadd.f32 %v757, %v770
        %v784 = vadd.f32 %v758, %v771
        %v785 = vadd.f32 %v772, 3.0
        %v786 = vadd.f32 %v773, 3.0
        %v787 = vadd.f32 %v774, 3.0
        %v788 = vadd.f32 %v775, 3.0
        %v789 = vadd.f32 %v776, 3.0
        %v790 = vadd.f32 %v777, 3.0
        %v791 = vadd.f32 %v778, 3.0
        %v792 = vadd.f32 %v779, 3.0
        %v793 = vadd.f32 %v780, 3.0
        %v794 = vadd.f32 %v781, 3.0
        %v795 = vadd.f32 %v782, 3.0
        %v796 = vadd.f32 %v783, 3.0
        %v797 = vadd.f32 %v784, 3.0
        %v798 = vmul.f32 %v733, %v785
        %v799 = vmul.f32 %v734, %v786
        %v800 = vmul.f32 %v735, %v787
        %v801 = vmul.f32 %v736, %v788
        %v802 = vmul.f32 %v737, %v789
        %v803 = vmul.f32 %v738, %v790
        %v804 = vmul.f32 %v739, %v791
        %v805 = vmul.f32 %v740, %v792
        %v806 = vmul.f32 %v741, %v793
        %v807 = vmul.f32 %v742, %v794
        %v808 = vmul.f32 %v743, %v795
        %v809 = vmul.f32 %v744, %v796
        %v810 = vmul.f32 %v745, %v797
        %v811 = vpack.c.bf16 %v799, %v798
        %v812 = vpack.c.bf16 %v801, %v800
        %v813 = vpack.c.bf16 %v803, %v802
        %v814 = vpack.c.bf16 %v805, %v804
        %v815 = vpack.c.bf16 %v807, %v806
        %v816 = vpack.c.bf16 %v809, %v808
        %v817 = vpack.c.bf16 %v810, %v810
        %v818 = vld [vmem:[%s2] sm:$0xf]
        %v819 = vld [vmem:[%s2 + $0x4] sm:$0xf]
        %v820 = vld [vmem:[%s2 + $0x8] sm:$0xf]
        %v821 = vld [vmem:[%s2 + $0xc] sm:$0xf]
        %v822 = vld [vmem:[%s2 + $0x10] sm:$0xf]
        %v823 = vld [vmem:[%s2 + $0x14] sm:$0xf]
        %v824 = vld [vmem:[%s2 + $0x18] sm:$0xf]
        %v825 = vld [vmem:[%s2 + $0x1c] sm:$0xf]
        %v826 = vld [vmem:[%s2 + $0x20] sm:$0xf]
        %v827 = vld [vmem:[%s2 + $0x24] sm:$0xf]
        %v828 = vld [vmem:[%s2 + $0x28] sm:$0xf]
        %v829 = vld [vmem:[%s2 + $0x2c] sm:$0xf]
        %v830 = vld [vmem:[%s2 + $0x30] sm:$0xf]
        %v831 = vld [vmem:[%s2 + $0x34] sm:$0xf]
        %v832 = vld [vmem:[%s2 + $0x38] sm:$0xf]
        %v833 = vld [vmem:[%s2 + $0x3c] sm:$0xf]
        %v834 = vld [vmem:[%s3] sm:$0x1]
        %v836 = vlaneseq
        %v837 = vshrl.u32 %v836, 7
        %v838 = vsub.s32 0, %v837
        %v839 = vrot.slane %v834, %v838
        %v857 = vunpack.c.l.b16 %v818
        %v858 = vunpack.c.l.b16 %v819
        %v859 = vunpack.c.l.b16 %v820
        %v860 = vunpack.c.l.b16 %v821
        %v861 = vunpack.c.l.b16 %v822
        %v862 = vunpack.c.l.b16 %v823
        %v863 = vunpack.c.l.b16 %v824
        %v864 = vunpack.c.l.b16 %v825
        %v865 = vunpack.c.l.b16 %v826
        %v866 = vunpack.c.l.b16 %v827
        %v867 = vunpack.c.l.b16 %v828
        %v868 = vunpack.c.l.b16 %v829
        %v869 = vunpack.c.l.b16 %v830
        %v870 = vunpack.c.l.b16 %v831
        %v871 = vunpack.c.l.b16 %v832
        %v872 = vunpack.c.l.b16 %v833
        %v873 = vpack.c.b16 %v858, %v857
        %v874 = vpack.c.b16 %v860, %v859
        %v875 = vpack.c.b16 %v862, %v861
        %v876 = vpack.c.b16 %v864, %v863
        %v877 = vpack.c.b16 %v866, %v865
        %v878 = vpack.c.b16 %v868, %v867
        %v879 = vpack.c.b16 %v870, %v869
        %v880 = vpack.c.b16 %v872, %v871
        %889 = vmatprep.subr.bf16.mxu0 0
        %890 = vmatpush1.bf16.msra.mxu0 %v880
        %891 = vmatprep.subr.bf16.mxu0 0
        %892 = vmatpush1.bf16.msra.mxu0 %v879
        %893 = vmatprep.subr.bf16.mxu0 0
        %894 = vmatpush1.bf16.msra.mxu0 %v878
        %895 = vmatprep.subr.bf16.mxu0 0
        %896 = vmatpush1.bf16.msra.mxu0 %v877
        %897 = vmatprep.subr.bf16.mxu0 0
        %898 = vmatpush1.bf16.msra.mxu0 %v876
        %899 = vmatprep.subr.bf16.mxu0 0
        %900 = vmatpush1.bf16.msra.mxu0 %v875
        %901 = vmatprep.subr.bf16.mxu0 0
        %902 = vmatpush1.bf16.msra.mxu0 %v874
        %903 = vmatprep.subr.bf16.mxu0 0
        %904 = vmatpush1.bf16.msra.mxu0 %v873
        %905 = vmatprep.subr.bf16.mxu0 0
        %906 = vmatpush2.bf16.msra.mxu0 0
        %907 = vmatprep.subr.bf16.mxu0 0
        %908 = vmatpush2.bf16.msra.mxu0 0
        %909 = vmatprep.subr.bf16.mxu0 0
        %910 = vmatpush2.bf16.msra.mxu0 0
        %911 = vmatprep.subr.bf16.mxu0 0
        %912 = vmatpush2.bf16.msra.mxu0 0
        %913 = vmatprep.subr.bf16.mxu0 0
        %914 = vmatpush2.bf16.msra.mxu0 0
        %915 = vmatprep.subr.bf16.mxu0 0
        %916 = vmatpush2.bf16.msra.mxu0 0
        %917 = vmatprep.subr.bf16.mxu0 0
        %918 = vmatpush2.bf16.msra.mxu0 0
        %919 = vmatprep.subr.bf16.mxu0 0
        %920 = vmatpush2.bf16.msra.mxu0 0
        %921 = vmatprep.mubr.bf16.mxu0 0
        %922 = vmatmul.mubr.bf16.gmra.mxu0 %v811
        %v923 = vpop.f32.mrf.mxu0
        %v924 = vadd.f32 %v839, %v923
        %v925 = vpop.f32.mrf.mxu0
        %v926 = vpop.f32.mrf.mxu0
        %v927 = vadd.f32 %v839, %v926
        %v928 = vpop.f32.mrf.mxu0
        %929 = vmatprep.mubr.bf16.mxu0 0
        %930 = vmatmul.mubr.bf16.gmra.mxu0 %v812
        %v931 = vpop.f32.mrf.mxu0
        %v932 = vadd.f32 %v839, %v931
        %v933 = vpop.f32.mrf.mxu0
        %v934 = vpop.f32.mrf.mxu0
        %v935 = vadd.f32 %v839, %v934
        %v936 = vpop.f32.mrf.mxu0
        %937 = vmatprep.mubr.bf16.mxu0 0
        %938 = vmatmul.mubr.bf16.gmra.mxu0 %v813
        %v939 = vpop.f32.mrf.mxu0
        %v940 = vadd.f32 %v839, %v939
        %v941 = vpop.f32.mrf.mxu0
        %v942 = vpop.f32.mrf.mxu0
        %v943 = vadd.f32 %v839, %v942
        %v944 = vpop.f32.mrf.mxu0
        %945 = vmatprep.mubr.bf16.mxu0 0
        %946 = vmatmul.mubr.bf16.gmra.mxu0 %v814
        %v947 = vpop.f32.mrf.mxu0
        %v948 = vadd.f32 %v839, %v947
        %v949 = vpop.f32.mrf.mxu0
        %v950 = vpop.f32.mrf.mxu0
        %v951 = vadd.f32 %v839, %v950
        %v952 = vpop.f32.mrf.mxu0
        %953 = vmatprep.mubr.bf16.mxu0 0
        %954 = vmatmul.mubr.bf16.gmra.mxu0 %v815
        %v955 = vpop.f32.mrf.mxu0
        %v956 = vadd.f32 %v839, %v955
        %v957 = vpop.f32.mrf.mxu0
        %v958 = vpop.f32.mrf.mxu0
        %v959 = vadd.f32 %v839, %v958
        %v960 = vpop.f32.mrf.mxu0
        %961 = vmatprep.mubr.bf16.mxu0 0
        %962 = vmatmul.mubr.bf16.gmra.mxu0 %v816
        %v963 = vpop.f32.mrf.mxu0
        %v964 = vadd.f32 %v839, %v963
        %v965 = vpop.f32.mrf.mxu0
        %v966 = vpop.f32.mrf.mxu0
        %v967 = vadd.f32 %v839, %v966
        %v968 = vpop.f32.mrf.mxu0
        %969 = vmatprep.mubr.bf16.mxu0 0
        %970 = vmatmul.mubr.bf16.gmra.mxu0 %v817
        %v971 = vpop.f32.mrf.mxu0
        %v972 = vadd.f32 %v839, %v971
        %v973 = vpop.f32.mrf.mxu0
        %v974 = vpop.f32.mrf.mxu0
        %v975 = vpop.f32.mrf.mxu0
        %976 = vdwg.mxu0
        %v977 = vmax.f32 %v924, 0.0
        %v978 = vmax.f32 %v927, 0.0
        %v979 = vmax.f32 %v932, 0.0
        %v980 = vmax.f32 %v935, 0.0
        %v981 = vmax.f32 %v940, 0.0
        %v982 = vmax.f32 %v943, 0.0
        %v983 = vmax.f32 %v948, 0.0
        %v984 = vmax.f32 %v951, 0.0
        %v985 = vmax.f32 %v956, 0.0
        %v986 = vmax.f32 %v959, 0.0
        %v987 = vmax.f32 %v964, 0.0
        %v988 = vmax.f32 %v967, 0.0
        %v989 = vmax.f32 %v972, 0.0
        %v990 = vpack.c.bf16 %v978, %v977
        %v991 = vpack.c.bf16 %v980, %v979
        %v992 = vpack.c.bf16 %v982, %v981
        %v993 = vpack.c.bf16 %v984, %v983
        %v994 = vpack.c.bf16 %v986, %v985
        %v995 = vpack.c.bf16 %v988, %v987
        %v996 = vpack.c.bf16 %v989, %v989
        %v997 = vld [vmem:[%s4] sm:$0xf]
        %v998 = vld [vmem:[%s4 + $0x4] sm:$0xf]
        %v999 = vld [vmem:[%s4 + $0x8] sm:$0xf]
        %v1000 = vld [vmem:[%s4 + $0xc] sm:$0xf]
        %v1001 = vld [vmem:[%s4 + $0x10] sm:$0xf]
        %v1002 = vld [vmem:[%s4 + $0x14] sm:$0xf]
        %v1003 = vld [vmem:[%s4 + $0x18] sm:$0xf]
        %v1004 = vld [vmem:[%s4 + $0x1c] sm:$0xf]
        %v1005 = vld [vmem:[%s4 + $0x20] sm:$0xf]
        %v1006 = vld [vmem:[%s4 + $0x24] sm:$0xf]
        %v1007 = vld [vmem:[%s4 + $0x28] sm:$0xf]
        %v1008 = vld [vmem:[%s4 + $0x2c] sm:$0xf]
        %v1009 = vld [vmem:[%s4 + $0x30] sm:$0xf]
        %v1010 = vld [vmem:[%s4 + $0x34] sm:$0xf]
        %v1011 = vld [vmem:[%s4 + $0x38] sm:$0xf]
        %v1012 = vld [vmem:[%s4 + $0x3c] sm:$0xf]
        %v1013 = vld [vmem:[%s5] sm:$0x1]
        %v1015 = vlaneseq
        %v1016 = vshrl.u32 %v1015, 7
        %v1017 = vsub.s32 0, %v1016
        %v1018 = vrot.slane %v1013, %v1017
        %v1036 = vunpack.c.l.b16 %v997
        %v1037 = vunpack.c.l.b16 %v998
        %v1038 = vunpack.c.l.b16 %v999
        %v1039 = vunpack.c.l.b16 %v1000
        %v1040 = vunpack.c.l.b16 %v1001
        %v1041 = vunpack.c.l.b16 %v1002
        %v1042 = vunpack.c.l.b16 %v1003
        %v1043 = vunpack.c.l.b16 %v1004
        %v1044 = vunpack.c.l.b16 %v1005
        %v1045 = vunpack.c.l.b16 %v1006
        %v1046 = vunpack.c.l.b16 %v1007
        %v1047 = vunpack.c.l.b16 %v1008
        %v1048 = vunpack.c.l.b16 %v1009
        %v1049 = vunpack.c.l.b16 %v1010
        %v1050 = vunpack.c.l.b16 %v1011
        %v1051 = vunpack.c.l.b16 %v1012
        %v1052 = vpack.c.b16 %v1037, %v1036
        %v1053 = vpack.c.b16 %v1039, %v1038
        %v1054 = vpack.c.b16 %v1041, %v1040
        %v1055 = vpack.c.b16 %v1043, %v1042
        %v1056 = vpack.c.b16 %v1045, %v1044
        %v1057 = vpack.c.b16 %v1047, %v1046
        %v1058 = vpack.c.b16 %v1049, %v1048
        %v1059 = vpack.c.b16 %v1051, %v1050
        %1068 = vmatprep.subr.bf16.mxu0 0
        %1069 = vmatpush1.bf16.msra.mxu0 %v1059
        %1070 = vmatprep.subr.bf16.mxu0 0
        %1071 = vmatpush1.bf16.msra.mxu0 %v1058
        %1072 = vmatprep.subr.bf16.mxu0 0
        %1073 = vmatpush1.bf16.msra.mxu0 %v1057
        %1074 = vmatprep.subr.bf16.mxu0 0
        %1075 = vmatpush1.bf16.msra.mxu0 %v1056
        %1076 = vmatprep.subr.bf16.mxu0 0
        %1077 = vmatpush1.bf16.msra.mxu0 %v1055
        %1078 = vmatprep.subr.bf16.mxu0 0
        %1079 = vmatpush1.bf16.msra.mxu0 %v1054
        %1080 = vmatprep.subr.bf16.mxu0 0
        %1081 = vmatpush1.bf16.msra.mxu0 %v1053
        %1082 = vmatprep.subr.bf16.mxu0 0
        %1083 = vmatpush1.bf16.msra.mxu0 %v1052
        %1084 = vmatprep.subr.bf16.mxu0 0
        %1085 = vmatpush2.bf16.msra.mxu0 0
        %1086 = vmatprep.subr.bf16.mxu0 0
        %1087 = vmatpush2.bf16.msra.mxu0 0
        %1088 = vmatprep.subr.bf16.mxu0 0
        %1089 = vmatpush2.bf16.msra.mxu0 0
        %1090 = vmatprep.subr.bf16.mxu0 0
        %1091 = vmatpush2.bf16.msra.mxu0 0
        %1092 = vmatprep.subr.bf16.mxu0 0
        %1093 = vmatpush2.bf16.msra.mxu0 0
        %1094 = vmatprep.subr.bf16.mxu0 0
        %1095 = vmatpush2.bf16.msra.mxu0 0
        %1096 = vmatprep.subr.bf16.mxu0 0
        %1097 = vmatpush2.bf16.msra.mxu0 0
        %1098 = vmatprep.subr.bf16.mxu0 0
        %1099 = vmatpush2.bf16.msra.mxu0 0
        %1100 = vmatprep.mubr.bf16.mxu0 0
        %1101 = vmatmul.mubr.bf16.gmra.mxu0 %v990
        %v1102 = vpop.f32.mrf.mxu0
        %v1103 = vadd.f32 %v1018, %v1102
        %v1104 = vpop.f32.mrf.mxu0
        %v1105 = vpop.f32.mrf.mxu0
        %v1106 = vadd.f32 %v1018, %v1105
        %v1107 = vpop.f32.mrf.mxu0
        %1108 = vmatprep.mubr.bf16.mxu0 0
        %1109 = vmatmul.mubr.bf16.gmra.mxu0 %v991
        %v1110 = vpop.f32.mrf.mxu0
        %v1111 = vadd.f32 %v1018, %v1110
        %v1112 = vpop.f32.mrf.mxu0
        %v1113 = vpop.f32.mrf.mxu0
        %v1114 = vadd.f32 %v1018, %v1113
        %v1115 = vpop.f32.mrf.mxu0
        %1116 = vmatprep.mubr.bf16.mxu0 0
        %1117 = vmatmul.mubr.bf16.gmra.mxu0 %v992
        %v1118 = vpop.f32.mrf.mxu0
        %v1119 = vadd.f32 %v1018, %v1118
        %v1120 = vpop.f32.mrf.mxu0
        %v1121 = vpop.f32.mrf.mxu0
        %v1122 = vadd.f32 %v1018, %v1121
        %v1123 = vpop.f32.mrf.mxu0
        %1124 = vmatprep.mubr.bf16.mxu0 0
        %1125 = vmatmul.mubr.bf16.gmra.mxu0 %v993
        %v1126 = vpop.f32.mrf.mxu0
        %v1127 = vadd.f32 %v1018, %v1126
        %v1128 = vpop.f32.mrf.mxu0
        %v1129 = vpop.f32.mrf.mxu0
        %v1130 = vadd.f32 %v1018, %v1129
        %v1131 = vpop.f32.mrf.mxu0
        %1132 = vmatprep.mubr.bf16.mxu0 0
        %1133 = vmatmul.mubr.bf16.gmra.mxu0 %v994
        %v1134 = vpop.f32.mrf.mxu0
        %v1135 = vadd.f32 %v1018, %v1134
        %v1136 = vpop.f32.mrf.mxu0
        %v1137 = vpop.f32.mrf.mxu0
        %v1138 = vadd.f32 %v1018, %v1137
        %v1139 = vpop.f32.mrf.mxu0
        %1140 = vmatprep.mubr.bf16.mxu0 0
        %1141 = vmatmul.mubr.bf16.gmra.mxu0 %v995
        %v1142 = vpop.f32.mrf.mxu0
        %v1143 = vadd.f32 %v1018, %v1142
        %v1144 = vpop.f32.mrf.mxu0
        %v1145 = vpop.f32.mrf.mxu0
        %v1146 = vadd.f32 %v1018, %v1145
        %v1147 = vpop.f32.mrf.mxu0
        %1148 = vmatprep.mubr.bf16.mxu0 0
        %1149 = vmatmul.mubr.bf16.gmra.mxu0 %v996
        %v1150 = vpop.f32.mrf.mxu0
        %v1151 = vadd.f32 %v1018, %v1150
        %v1152 = vpop.f32.mrf.mxu0
        %v1153 = vpop.f32.mrf.mxu0
        %v1154 = vpop.f32.mrf.mxu0
        %1155 = vdwg.mxu0
        %v1156 = vmax.f32 %v1103, 0.0
        %v1157 = vmax.f32 %v1106, 0.0
        %v1158 = vmax.f32 %v1111, 0.0
        %v1159 = vmax.f32 %v1114, 0.0
        %v1160 = vmax.f32 %v1119, 0.0
        %v1161 = vmax.f32 %v1122, 0.0
        %v1162 = vmax.f32 %v1127, 0.0
        %v1163 = vmax.f32 %v1130, 0.0
        %v1164 = vmax.f32 %v1135, 0.0
        %v1165 = vmax.f32 %v1138, 0.0
        %v1166 = vmax.f32 %v1143, 0.0
        %v1167 = vmax.f32 %v1146, 0.0
        %v1168 = vmax.f32 %v1151, 0.0
        %v1169 = vpack.c.bf16 %v1157, %v1156
        %v1170 = vpack.c.bf16 %v1159, %v1158
        %v1171 = vpack.c.bf16 %v1161, %v1160
        %v1172 = vpack.c.bf16 %v1163, %v1162
        %v1173 = vpack.c.bf16 %v1165, %v1164
        %v1174 = vpack.c.bf16 %v1167, %v1166
        %v1175 = vpack.c.bf16 %v1168, %v1168
        %v1176 = vld [vmem:[%s6] sm:$0xf]
        %v1177 = vld [vmem:[%s6 + $0x4] sm:$0xf]
        %v1178 = vld [vmem:[%s6 + $0x8] sm:$0xf]
        %v1179 = vld [vmem:[%s6 + $0xc] sm:$0xf]
        %v1180 = vld [vmem:[%s6 + $0x10] sm:$0xf]
        %v1181 = vld [vmem:[%s6 + $0x14] sm:$0xf]
        %v1182 = vld [vmem:[%s6 + $0x18] sm:$0xf]
        %v1183 = vld [vmem:[%s6 + $0x1c] sm:$0xf]
        %v1184 = vld [vmem:[%s6 + $0x20] sm:$0xf]
        %v1185 = vld [vmem:[%s6 + $0x24] sm:$0xf]
        %v1186 = vld [vmem:[%s6 + $0x28] sm:$0xf]
        %v1187 = vld [vmem:[%s6 + $0x2c] sm:$0xf]
        %v1188 = vld [vmem:[%s6 + $0x30] sm:$0xf]
        %v1189 = vld [vmem:[%s6 + $0x34] sm:$0xf]
        %v1190 = vld [vmem:[%s6 + $0x38] sm:$0xf]
        %v1191 = vld [vmem:[%s6 + $0x3c] sm:$0xf]
        %v1192 = vld [vmem:[%s7] sm:$0x1]
        %v1194 = vlaneseq
        %v1195 = vshrl.u32 %v1194, 7
        %v1196 = vsub.s32 0, %v1195
        %v1197 = vrot.slane %v1192, %v1196
        %v1215 = vunpack.c.l.b16 %v1176
        %v1216 = vunpack.c.l.b16 %v1177
        %v1217 = vunpack.c.l.b16 %v1178
        %v1218 = vunpack.c.l.b16 %v1179
        %v1219 = vunpack.c.l.b16 %v1180
        %v1220 = vunpack.c.l.b16 %v1181
        %v1221 = vunpack.c.l.b16 %v1182
        %v1222 = vunpack.c.l.b16 %v1183
        %v1223 = vunpack.c.l.b16 %v1184
        %v1224 = vunpack.c.l.b16 %v1185
        %v1225 = vunpack.c.l.b16 %v1186
        %v1226 = vunpack.c.l.b16 %v1187
        %v1227 = vunpack.c.l.b16 %v1188
        %v1228 = vunpack.c.l.b16 %v1189
        %v1229 = vunpack.c.l.b16 %v1190
        %v1230 = vunpack.c.l.b16 %v1191
        %v1231 = vpack.c.b16 %v1216, %v1215
        %v1232 = vpack.c.b16 %v1218, %v1217
        %v1233 = vpack.c.b16 %v1220, %v1219
        %v1234 = vpack.c.b16 %v1222, %v1221
        %v1235 = vpack.c.b16 %v1224, %v1223
        %v1236 = vpack.c.b16 %v1226, %v1225
        %v1237 = vpack.c.b16 %v1228, %v1227
        %v1238 = vpack.c.b16 %v1230, %v1229
        %1247 = vmatprep.subr.bf16.mxu0 0
        %1248 = vmatpush1.bf16.msra.mxu0 %v1238
        %1249 = vmatprep.subr.bf16.mxu0 0
        %1250 = vmatpush1.bf16.msra.mxu0 %v1237
        %1251 = vmatprep.subr.bf16.mxu0 0
        %1252 = vmatpush1.bf16.msra.mxu0 %v1236
        %1253 = vmatprep.subr.bf16.mxu0 0
        %1254 = vmatpush1.bf16.msra.mxu0 %v1235
        %1255 = vmatprep.subr.bf16.mxu0 0
        %1256 = vmatpush1.bf16.msra.mxu0 %v1234
        %1257 = vmatprep.subr.bf16.mxu0 0
        %1258 = vmatpush1.bf16.msra.mxu0 %v1233
        %1259 = vmatprep.subr.bf16.mxu0 0
        %1260 = vmatpush1.bf16.msra.mxu0 %v1232
        %1261 = vmatprep.subr.bf16.mxu0 0
        %1262 = vmatpush1.bf16.msra.mxu0 %v1231
        %1263 = vmatprep.subr.bf16.mxu0 0
        %1264 = vmatpush2.bf16.msra.mxu0 0
        %1265 = vmatprep.subr.bf16.mxu0 0
        %1266 = vmatpush2.bf16.msra.mxu0 0
        %1267 = vmatprep.subr.bf16.mxu0 0
        %1268 = vmatpush2.bf16.msra.mxu0 0
        %1269 = vmatprep.subr.bf16.mxu0 0
        %1270 = vmatpush2.bf16.msra.mxu0 0
        %1271 = vmatprep.subr.bf16.mxu0 0
        %1272 = vmatpush2.bf16.msra.mxu0 0
        %1273 = vmatprep.subr.bf16.mxu0 0
        %1274 = vmatpush2.bf16.msra.mxu0 0
        %1275 = vmatprep.subr.bf16.mxu0 0
        %1276 = vmatpush2.bf16.msra.mxu0 0
        %1277 = vmatprep.subr.bf16.mxu0 0
        %1278 = vmatpush2.bf16.msra.mxu0 0
        %1279 = vmatprep.mubr.bf16.mxu0 0
        %1280 = vmatmul.mubr.bf16.gmra.mxu0 %v1169
        %v1281 = vpop.f32.mrf.mxu0
        %v1282 = vadd.f32 %v1197, %v1281
        %v1283 = vpop.f32.mrf.mxu0
        %v1284 = vpop.f32.mrf.mxu0
        %v1285 = vadd.f32 %v1197, %v1284
        %v1286 = vpop.f32.mrf.mxu0
        %1287 = vmatprep.mubr.bf16.mxu0 0
        %1288 = vmatmul.mubr.bf16.gmra.mxu0 %v1170
        %v1289 = vpop.f32.mrf.mxu0
        %v1290 = vadd.f32 %v1197, %v1289
        %v1291 = vpop.f32.mrf.mxu0
        %v1292 = vpop.f32.mrf.mxu0
        %v1293 = vadd.f32 %v1197, %v1292
        %v1294 = vpop.f32.mrf.mxu0
        %1295 = vmatprep.mubr.bf16.mxu0 0
        %1296 = vmatmul.mubr.bf16.gmra.mxu0 %v1171
        %v1297 = vpop.f32.mrf.mxu0
        %v1298 = vadd.f32 %v1197, %v1297
        %v1299 = vpop.f32.mrf.mxu0
        %v1300 = vpop.f32.mrf.mxu0
        %v1301 = vadd.f32 %v1197, %v1300
        %v1302 = vpop.f32.mrf.mxu0
        %1303 = vmatprep.mubr.bf16.mxu0 0
        %1304 = vmatmul.mubr.bf16.gmra.mxu0 %v1172
        %v1305 = vpop.f32.mrf.mxu0
        %v1306 = vadd.f32 %v1197, %v1305
        %v1307 = vpop.f32.mrf.mxu0
        %v1308 = vpop.f32.mrf.mxu0
        %v1309 = vadd.f32 %v1197, %v1308
        %v1310 = vpop.f32.mrf.mxu0
        %1311 = vmatprep.mubr.bf16.mxu0 0
        %1312 = vmatmul.mubr.bf16.gmra.mxu0 %v1173
        %v1313 = vpop.f32.mrf.mxu0
        %v1314 = vadd.f32 %v1197, %v1313
        %v1315 = vpop.f32.mrf.mxu0
        %v1316 = vpop.f32.mrf.mxu0
        %v1317 = vadd.f32 %v1197, %v1316
        %v1318 = vpop.f32.mrf.mxu0
        %1319 = vmatprep.mubr.bf16.mxu0 0
        %1320 = vmatmul.mubr.bf16.gmra.mxu0 %v1174
        %v1321 = vpop.f32.mrf.mxu0
        %v1322 = vadd.f32 %v1197, %v1321
        %v1323 = vpop.f32.mrf.mxu0
        %v1324 = vpop.f32.mrf.mxu0
        %v1325 = vadd.f32 %v1197, %v1324
        %v1326 = vpop.f32.mrf.mxu0
        %1327 = vmatprep.mubr.bf16.mxu0 0
        %1328 = vmatmul.mubr.bf16.gmra.mxu0 %v1175
        %v1329 = vpop.f32.mrf.mxu0
        %v1330 = vadd.f32 %v1197, %v1329
        %v1331 = vpop.f32.mrf.mxu0
        %v1332 = vpop.f32.mrf.mxu0
        %v1333 = vpop.f32.mrf.mxu0
        %1334 = vdwg.mxu0
        %v1335 = vmax.f32 %v1282, 0.0
        %v1336 = vmax.f32 %v1285, 0.0
        %v1337 = vmax.f32 %v1290, 0.0
        %v1338 = vmax.f32 %v1293, 0.0
        %v1339 = vmax.f32 %v1298, 0.0
        %v1340 = vmax.f32 %v1301, 0.0
        %v1341 = vmax.f32 %v1306, 0.0
        %v1342 = vmax.f32 %v1309, 0.0
        %v1343 = vmax.f32 %v1314, 0.0
        %v1344 = vmax.f32 %v1317, 0.0
        %v1345 = vmax.f32 %v1322, 0.0
        %v1346 = vmax.f32 %v1325, 0.0
        %v1347 = vmax.f32 %v1330, 0.0
        %v1348 = vpack.c.bf16 %v1336, %v1335
        %v1349 = vpack.c.bf16 %v1338, %v1337
        %v1350 = vpack.c.bf16 %v1340, %v1339
        %v1351 = vpack.c.bf16 %v1342, %v1341
        %v1352 = vpack.c.bf16 %v1344, %v1343
        %v1353 = vpack.c.bf16 %v1346, %v1345
        %v1354 = vpack.c.bf16 %v1347, %v1347
        %v1355 = vld [vmem:[#allocation2] sm:$0xf]
        %v1356 = vld [vmem:[#allocation2 + $0x4] sm:$0xf]
        %v1357 = vld [vmem:[#allocation2 + $0x8] sm:$0xf]
        %v1358 = vld [vmem:[#allocation2 + $0xc] sm:$0xf]
        %v1359 = vld [vmem:[#allocation2 + $0x10] sm:$0xf]
        %v1360 = vld [vmem:[#allocation2 + $0x14] sm:$0xf]
        %v1361 = vld [vmem:[#allocation2 + $0x18] sm:$0xf]
        %v1362 = vld [vmem:[#allocation2 + $0x1c] sm:$0xf]
        %v1363 = vld [vmem:[#allocation2 + $0x20] sm:$0xf]
        %v1364 = vld [vmem:[#allocation2 + $0x24] sm:$0xf]
        %v1365 = vld [vmem:[#allocation2 + $0x28] sm:$0xf]
        %v1366 = vld [vmem:[#allocation2 + $0x2c] sm:$0xf]
        %v1367 = vld [vmem:[#allocation2 + $0x30] sm:$0xf]
        %v1368 = vld [vmem:[#allocation2 + $0x34] sm:$0xf]
        %v1369 = vld [vmem:[#allocation2 + $0x38] sm:$0xf]
        %v1370 = vld [vmem:[#allocation2 + $0x3c] sm:$0xf]
        %v1371 = vld [vmem:[%s9] sm:$0x1]
        %v1373 = vlaneseq
        %v1374 = vshrl.u32 %v1373, 7
        %v1375 = vsub.s32 0, %v1374
        %v1376 = vrot.slane %v1371, %v1375
        %v1394 = vunpack.c.l.b16 %v1355
        %v1395 = vunpack.c.l.b16 %v1356
        %v1396 = vunpack.c.l.b16 %v1357
        %v1397 = vunpack.c.l.b16 %v1358
        %v1398 = vunpack.c.l.b16 %v1359
        %v1399 = vunpack.c.l.b16 %v1360
        %v1400 = vunpack.c.l.b16 %v1361
        %v1401 = vunpack.c.l.b16 %v1362
        %v1402 = vunpack.c.l.b16 %v1363
        %v1403 = vunpack.c.l.b16 %v1364
        %v1404 = vunpack.c.l.b16 %v1365
        %v1405 = vunpack.c.l.b16 %v1366
        %v1406 = vunpack.c.l.b16 %v1367
        %v1407 = vunpack.c.l.b16 %v1368
        %v1408 = vunpack.c.l.b16 %v1369
        %v1409 = vunpack.c.l.b16 %v1370
        %v1410 = vpack.c.b16 %v1395, %v1394
        %v1411 = vpack.c.b16 %v1397, %v1396
        %v1412 = vpack.c.b16 %v1399, %v1398
        %v1413 = vpack.c.b16 %v1401, %v1400
        %v1414 = vpack.c.b16 %v1403, %v1402
        %v1415 = vpack.c.b16 %v1405, %v1404
        %v1416 = vpack.c.b16 %v1407, %v1406
        %v1417 = vpack.c.b16 %v1409, %v1408
        %1426 = vmatprep.subr.bf16.mxu0 0
        %1427 = vmatpush1.bf16.msra.mxu0 %v1417
        %1428 = vmatprep.subr.bf16.mxu0 0
        %1429 = vmatpush1.bf16.msra.mxu0 %v1416
        %1430 = vmatprep.subr.bf16.mxu0 0
        %1431 = vmatpush1.bf16.msra.mxu0 %v1415
        %1432 = vmatprep.subr.bf16.mxu0 0
        %1433 = vmatpush1.bf16.msra.mxu0 %v1414
        %1434 = vmatprep.subr.bf16.mxu0 0
        %1435 = vmatpush1.bf16.msra.mxu0 %v1413
        %1436 = vmatprep.subr.bf16.mxu0 0
        %1437 = vmatpush1.bf16.msra.mxu0 %v1412
        %1438 = vmatprep.subr.bf16.mxu0 0
        %1439 = vmatpush1.bf16.msra.mxu0 %v1411
        %1440 = vmatprep.subr.bf16.mxu0 0
        %1441 = vmatpush1.bf16.msra.mxu0 %v1410
        %1442 = vmatprep.subr.bf16.mxu0 0
        %1443 = vmatpush2.bf16.msra.mxu0 0
        %1444 = vmatprep.subr.bf16.mxu0 0
        %1445 = vmatpush2.bf16.msra.mxu0 0
        %1446 = vmatprep.subr.bf16.mxu0 0
        %1447 = vmatpush2.bf16.msra.mxu0 0
        %1448 = vmatprep.subr.bf16.mxu0 0
        %1449 = vmatpush2.bf16.msra.mxu0 0
        %1450 = vmatprep.subr.bf16.mxu0 0
        %1451 = vmatpush2.bf16.msra.mxu0 0
        %1452 = vmatprep.subr.bf16.mxu0 0
        %1453 = vmatpush2.bf16.msra.mxu0 0
        %1454 = vmatprep.subr.bf16.mxu0 0
        %1455 = vmatpush2.bf16.msra.mxu0 0
        %1456 = vmatprep.subr.bf16.mxu0 0
        %1457 = vmatpush2.bf16.msra.mxu0 0
        %1458 = vmatprep.mubr.bf16.mxu0 0
        %1459 = vmatmul.mubr.bf16.gmra.mxu0 %v1348
        %v1460 = vpop.f32.mrf.mxu0
        %v1461 = vadd.f32 %v1376, %v1460
        %v1462 = vpop.f32.mrf.mxu0
        %v1463 = vpop.f32.mrf.mxu0
        %v1464 = vadd.f32 %v1376, %v1463
        %v1465 = vpop.f32.mrf.mxu0
        %1466 = vmatprep.mubr.bf16.mxu0 0
        %1467 = vmatmul.mubr.bf16.gmra.mxu0 %v1349
        %v1468 = vpop.f32.mrf.mxu0
        %v1469 = vadd.f32 %v1376, %v1468
        %v1470 = vpop.f32.mrf.mxu0
        %v1471 = vpop.f32.mrf.mxu0
        %v1472 = vadd.f32 %v1376, %v1471
        %v1473 = vpop.f32.mrf.mxu0
        %1474 = vmatprep.mubr.bf16.mxu0 0
        %1475 = vmatmul.mubr.bf16.gmra.mxu0 %v1350
        %v1476 = vpop.f32.mrf.mxu0
        %v1477 = vadd.f32 %v1376, %v1476
        %v1478 = vpop.f32.mrf.mxu0
        %v1479 = vpop.f32.mrf.mxu0
        %v1480 = vadd.f32 %v1376, %v1479
        %v1481 = vpop.f32.mrf.mxu0
        %1482 = vmatprep.mubr.bf16.mxu0 0
        %1483 = vmatmul.mubr.bf16.gmra.mxu0 %v1351
        %v1484 = vpop.f32.mrf.mxu0
        %v1485 = vadd.f32 %v1376, %v1484
        %v1486 = vpop.f32.mrf.mxu0
        %v1487 = vpop.f32.mrf.mxu0
        %v1488 = vadd.f32 %v1376, %v1487
        %v1489 = vpop.f32.mrf.mxu0
        %1490 = vmatprep.mubr.bf16.mxu0 0
        %1491 = vmatmul.mubr.bf16.gmra.mxu0 %v1352
        %v1492 = vpop.f32.mrf.mxu0
        %v1493 = vadd.f32 %v1376, %v1492
        %v1494 = vpop.f32.mrf.mxu0
        %v1495 = vpop.f32.mrf.mxu0
        %v1496 = vadd.f32 %v1376, %v1495
        %v1497 = vpop.f32.mrf.mxu0
        %1498 = vmatprep.mubr.bf16.mxu0 0
        %1499 = vmatmul.mubr.bf16.gmra.mxu0 %v1353
        %v1500 = vpop.f32.mrf.mxu0
        %v1501 = vadd.f32 %v1376, %v1500
        %v1502 = vpop.f32.mrf.mxu0
        %v1503 = vpop.f32.mrf.mxu0
        %v1504 = vadd.f32 %v1376, %v1503
        %v1505 = vpop.f32.mrf.mxu0
        %1506 = vmatprep.mubr.bf16.mxu0 0
        %1507 = vmatmul.mubr.bf16.gmra.mxu0 %v1354
        %v1508 = vpop.f32.mrf.mxu0
        %v1509 = vadd.f32 %v1376, %v1508
        %v1510 = vpop.f32.mrf.mxu0
        %v1511 = vpop.f32.mrf.mxu0
        %v1512 = vpop.f32.mrf.mxu0
        %1513 = vdwg.mxu0
        %v1514 = vmax.f32 %v1461, 0.0
        %v1515 = vmax.f32 %v1464, 0.0
        %v1516 = vmax.f32 %v1469, 0.0
        %v1517 = vmax.f32 %v1472, 0.0
        %v1518 = vmax.f32 %v1477, 0.0
        %v1519 = vmax.f32 %v1480, 0.0
        %v1520 = vmax.f32 %v1485, 0.0
        %v1521 = vmax.f32 %v1488, 0.0
        %v1522 = vmax.f32 %v1493, 0.0
        %v1523 = vmax.f32 %v1496, 0.0
        %v1524 = vmax.f32 %v1501, 0.0
        %v1525 = vmax.f32 %v1504, 0.0
        %v1526 = vmax.f32 %v1509, 0.0
        %v1527 = vld [vmem:[%s10] sm:$0x1]
        %v1529 = vlaneseq
        %v1530 = vshrl.u32 %v1529, 7
        %v1531 = vsub.s32 0, %v1530
        %v1532 = vrot.slane %v1527, %v1531
        %v1534 = vmul.f32 %v1514, %v1532
        %v1535 = vmul.f32 %v1515, %v1532
        %v1536 = vmul.f32 %v1516, %v1532
        %v1537 = vmul.f32 %v1517, %v1532
        %v1538 = vmul.f32 %v1518, %v1532
        %v1539 = vmul.f32 %v1519, %v1532
        %v1540 = vmul.f32 %v1520, %v1532
        %v1541 = vmul.f32 %v1521, %v1532
        %v1542 = vmul.f32 %v1522, %v1532
        %v1543 = vmul.f32 %v1523, %v1532
        %v1544 = vmul.f32 %v1524, %v1532
        %v1545 = vmul.f32 %v1525, %v1532
        %v1546 = vmul.f32 %v1526, %v1532
        %1547 = vadd.xlane.f32.xlu0 %v1534
        %v1548 = vpop.xlane.xlu0 %1547
        %1549 = vadd.xlane.f32.xlu0 %v1535
        %v1550 = vpop.xlane.xlu0 %1549
        %1551 = vadd.xlane.f32.xlu0 %v1536
        %v1552 = vpop.xlane.xlu0 %1551
        %1553 = vadd.xlane.f32.xlu0 %v1537
        %v1554 = vpop.xlane.xlu0 %1553
        %1555 = vadd.xlane.f32.xlu0 %v1538
        %v1556 = vpop.xlane.xlu0 %1555
        %1557 = vadd.xlane.f32.xlu0 %v1539
        %v1558 = vpop.xlane.xlu0 %1557
        %1559 = vadd.xlane.f32.xlu0 %v1540
        %v1560 = vpop.xlane.xlu0 %1559
        %1561 = vadd.xlane.f32.xlu0 %v1541
        %v1562 = vpop.xlane.xlu0 %1561
        %1563 = vadd.xlane.f32.xlu0 %v1542
        %v1564 = vpop.xlane.xlu0 %1563
        %1565 = vadd.xlane.f32.xlu0 %v1543
        %v1566 = vpop.xlane.xlu0 %1565
        %1567 = vadd.xlane.f32.xlu0 %v1544
        %v1568 = vpop.xlane.xlu0 %1567
        %1569 = vadd.xlane.f32.xlu0 %v1545
        %v1570 = vpop.xlane.xlu0 %1569
        %1571 = vadd.xlane.f32.xlu0 %v1546
        %v1572 = vpop.xlane.xlu0 %1571
        %vm1573 = vcmask 7168
        %1574 = vst.msk [vmem:[%s403] sm:$0xff] %vm1573, %v1548
        %1575 = vst.msk [vmem:[%s403 + $0x8] sm:$0xff] %vm1573, %v1550
        %1576 = vst.msk [vmem:[%s403 + $0x10] sm:$0xff] %vm1573, %v1552
        %1577 = vst.msk [vmem:[%s403 + $0x18] sm:$0xff] %vm1573, %v1554
        %1578 = vst.msk [vmem:[%s403 + $0x20] sm:$0xff] %vm1573, %v1556
        %1579 = vst.msk [vmem:[%s403 + $0x28] sm:$0xff] %vm1573, %v1558
        %1580 = vst.msk [vmem:[%s403 + $0x30] sm:$0xff] %vm1573, %v1560
        %1581 = vst.msk [vmem:[%s403 + $0x38] sm:$0xff] %vm1573, %v1562
        %1582 = vst.msk [vmem:[%s403 + $0x40] sm:$0xff] %vm1573, %v1564
        %1583 = vst.msk [vmem:[%s403 + $0x48] sm:$0xff] %vm1573, %v1566
        %1584 = vst.msk [vmem:[%s403 + $0x50] sm:$0xff] %vm1573, %v1568
        %1585 = vst.msk [vmem:[%s403 + $0x58] sm:$0xff] %vm1573, %v1570
        %1586 = vst.msk [vmem:[%s403 + $0x60] sm:$0xff] %vm1573, %v1572
        %s1587 = smul.u32 13, %s23
        %p1588 = scmp.lt.s32.totalorder %s1587, 25
        %s1589 = scalar_select %p1588, %s1587, 25
        %s1590 = smul.addr %s1589, 8
        %s1591 = scalar_lea.vmem %s11, %s1590
        // Predicated region
        $region69: #{tpu_custom_call.1} parent=63 // pred_check
          %p1592 = pneg %p277
        $region70: #{tpu_custom_call.1} parent=63 // pred_check_branch
          %1594 = sbr.rel (%p1592) target = $region72
        $region71: #{tpu_custom_call.1} parent=63 // pred_region
          %s1595 = smul.u32 13, %s23
        $region72: #{tpu_custom_call.1} parent=63 // pred_fallthru
          _
      $region64: #{tpu_custom_call.1} parent=5 // pred_fallthru
        _
      %p1596 = scmp.le.s32.totalorder 2, %s18
      // Predicated region
      $region73: #{tpu_custom_call.1} parent=5 // pred_check
        %p1597 = pneg %p1596
      $region74: #{tpu_custom_call.1} parent=5 // pred_check_branch
        %1599 = sbr.rel (%p1597) target = $region76
      $region75: #{tpu_custom_call.1} parent=5 // pred_region
        %s1600 = ssub.s32 %s18, 2
        // Predicated region
        $region77: #{tpu_custom_call.1} parent=75 // pred_check
          %p1601 = pneg %p283
        $region78: #{tpu_custom_call.1} parent=75 // pred_check_branch
          %1603 = sbr.rel (%p1601) target = $region80
        $region79: #{tpu_custom_call.1} parent=75 // pred_region
          %s1604 = smul.u32 13, %s24
          %p1605 = scmp.lt.s32.totalorder %s1604, 25
          %s1606 = scalar_select %p1605, %s1604, 25
          %s1607 = smul.addr %s1606, 8
          %s1608 = scalar_lea.vmem %s11, %s1607
        $region80: #{tpu_custom_call.1} parent=75 // pred_fallthru
          _
      $region76: #{tpu_custom_call.1} parent=5 // pred_fallthru
        _
    $region6: #{tpu_custom_call.1} parent=1 // loop_footer
      %s22 = sadd.s32 1, %s18
    $region7: #{tpu_custom_call.1} parent=1 // loop_footer_branch
      %17 = sbr.rel target = $region3
    $region8: #{tpu_custom_call.1} parent=1 // loop_exit
      _
    %1609 = vsyncpa [#allocation3], 1
    %s1610 = scalar_lea.sflag [#allocation3], 1
    %1611 = vsyncpa %s1610, 1

</llo_original>
